<compile_context>
chip_gen: v7x
topology: tpu7x:2x2x1
jax: 0.10.0
libtpu: 0.0.40
codegen_flags: <defaults>
</compile_context>

<pallas_src>
from collections import namedtuple
from functools import partial

import jax
import jax.numpy as jnp
from jax import lax
from jax.experimental import pallas as pl
from jax.experimental.pallas import tpu as pltpu


class ForwardMode:
    PREFILL = 0
    DECODE = 1


InputMetadata = namedtuple(
    "InputMetadata",
    [
        "forward_mode",
        "seq_lens",
        "prefix_lens",
        "return_logprob",
        "extend_start_loc",
        "extend_seq_lens",
    ],
)

_NEG_INF = -1e30


def _round_up(x, m):
    return ((x + m - 1) // m) * m


def _pad2d(a, rows, cols):
    r, c = a.shape
    if r == rows and c == cols:
        return a
    return jnp.pad(a, ((0, rows - r), (0, cols - c)))


def _vmem_limits():
    """(working-set budget, vmem_limit_bytes) gated by the chip generation."""
    cap = None
    try:
        cap = int(pltpu.get_tpu_info().vmem_capacity_bytes)
    except Exception:
        cap = None
    if cap is None or cap <= 0:
        cap = 64 * 1024 * 1024                      # conservative: v7x per-TC
    if cap >= 100 * 1024 * 1024:                    # v5e / v6e: 128 MiB physical
        limit = 96 * 1024 * 1024
    else:                                           # v7x: 64 MiB per TC
        limit = 48 * 1024 * 1024
    return limit - 12 * 1024 * 1024, limit


def _choose_tiles(T, V, H, itemsize, *, logits_out, b_rows=0):
    """Pick (tm, tn, tk) as large as the per-chip VMEM budget allows."""
    budget, limit = _vmem_limits()
    big_vmem = limit > 64 * 1024 * 1024
    tn = min(2048, _round_up(V, 128))
    tk = min(512, _round_up(H, 128))
    tm_cap = min(1024 if big_vmem else 512, _round_up(T, 16))

    def est(tm_, tn_, tk_):
        Hp = _round_up(H, tk_)
        v = 2 * tm_ * Hp * itemsize           # resident hidden panel, dbl-buffered
        v += 3 * tn_ * tk_ * itemsize         # weight stream, Buffered(3)
        v += tm_ * tn_ * 4                    # f32 accumulator
        v += 2 * tm_ * 256 * 4                # stats output slab
        if logits_out:
            v += 2 * tm_ * tn_ * itemsize     # logits output tile
        if b_rows:
            v += 2 * b_rows * Hp * itemsize   # resident last-hidden panel
            v += b_rows * tn_ * 4             # last-logits accumulator
            v += 2 * b_rows * tn_ * itemsize  # last-logits output tile
        return v

    cands = [tm_cap] + [c for c in
                        (1024, 768, 512, 384, 256, 192, 128, 96, 64, 48, 32, 16, 8)
                        if c < tm_cap]
    tm = cands[-1]
    for c in cands:
        if est(c, tn, tk) <= budget:
            tm = c
            break
    while est(tm, tn, tk) > budget and tn > 256:
        tn = max(256, _round_up(tn // 2, 128))
    while est(tm, tn, tk) > budget and tk > 128:
        tk = max(128, _round_up(tk // 2, 128))
    return tm, tn, tk, limit


def _w_spec(tn, tk, n_stream_steps):
    """Weight BlockSpec: triple-buffered when the stream is long enough."""
    if n_stream_steps >= 3:
        return pl.BlockSpec((tn, tk), lambda i, j, k: (j, k),
                            pipeline_mode=pl.Buffered(3))
    return pl.BlockSpec((tn, tk), lambda i, j, k: (j, k))


# ----------------------------------------------------------------------------
# Kernel bodies
# ----------------------------------------------------------------------------
def _matmul_kernel(h_ref, w_ref, o_ref, acc_ref):
    """o = h @ w.T.  h is a resident (tm, Hp) panel sliced along K in-kernel."""
    k = pl.program_id(2)
    nk = pl.num_programs(2)
    tk = w_ref.shape[1]

    @pl.when(k == 0)
    def _():
        acc_ref[...] = jnp.zeros_like(acc_ref)

    start = pl.multiple_of(k * tk, 128)
    acc_ref[...] += lax.dot_general(
        h_ref[:, pl.ds(start, tk)], w_ref[...],
        (((1,), (1,)), ((), ())), preferred_element_type=jnp.float32)

    @pl.when(k == nk - 1)
    def _():
        o_ref[...] = acc_ref[...].astype(o_ref.dtype)


def _softmax_update(m_sc, l_sc, lm):
    """Online-softmax running (max, sum-of-exp) update from one logits tile."""
    m_prev = m_sc[...]
    m_new = jnp.maximum(m_prev, jnp.max(lm, axis=-1, keepdims=True))
    l_sc[...] = (jnp.exp(m_prev - m_new) * l_sc[...]
                 + jnp.sum(jnp.exp(lm - m_new), axis=-1, keepdims=True))
    m_sc[...] = m_new


def _write_stats(stats_ref, m_sc, l_sc):
    tm = stats_ref.shape[0]
    stats_ref[:, 0:128] = jnp.broadcast_to(m_sc[...], (tm, 128))
    stats_ref[:, 128:256] = jnp.broadcast_to(l_sc[...], (tm, 128))


def _matmul_stats_kernel(h_ref, w_ref, o_ref, stats_ref, acc_ref, m_sc, l_sc,
                         *, vocab_size):
    """logits = h @ w.T plus per-row online-softmax stats (m, l)."""
    j = pl.program_id(1)
    k = pl.program_id(2)
    nj = pl.num_programs(1)
    nk = pl.num_programs(2)
    tk = w_ref.shape[1]

    @pl.when(jnp.logical_and(j == 0, k == 0))
    def _():
        m_sc[...] = jnp.full(m_sc.shape, _NEG_INF, dtype=m_sc.dtype)
        l_sc[...] = jnp.zeros_like(l_sc)

    @pl.when(k == 0)
    def _():
        acc_ref[...] = jnp.zeros_like(acc_ref)

    start = pl.multiple_of(k * tk, 128)
    acc_ref[...] += lax.dot_general(
        h_ref[:, pl.ds(start, tk)], w_ref[...],
        (((1,), (1,)), ((), ())), preferred_element_type=jnp.float32)

    @pl.when(k == nk - 1)
    def _():
        logits = acc_ref[...]
        o_ref[...] = logits.astype(o_ref.dtype)

        @pl.when(j < nj - 1)          # interior vocab tiles: no padded columns
        def _():
            _softmax_update(m_sc, l_sc, logits)

        @pl.when(j == nj - 1)         # last vocab tile: mask padded columns
        def _():
            tn = logits.shape[1]
            col = j * tn + lax.broadcasted_iota(jnp.int32, logits.shape, 1)
            _softmax_update(m_sc, l_sc,
                            jnp.where(col < vocab_size, logits, _NEG_INF))

        @pl.when(j == nj - 1)
        def _():
            _write_stats(stats_ref, m_sc, l_sc)


def _prefill_stats_kernel(h_ref, lh_ref, w_ref, stats_ref, last_ref,
                          acc_ref, lacc_ref, m_sc, l_sc, *, vocab_size):
    """Fused: per-row (m, l) stats for h @ w.T, plus last_logits = lh @ w.T.

    The last_logits blocks ride the SAME weight stream (no second HBM pass of
    the weight).  They are recomputed identically for every M tile (B is tiny
    vs tm), so the (0, j) output block is always rewritten with the same
    values; the i axis is kept sequential ("arbitrary") for safety.
    """
    j = pl.program_id(1)
    k = pl.program_id(2)
    nj = pl.num_programs(1)
    nk = pl.num_programs(2)
    tk = w_ref.shape[1]

    @pl.when(jnp.logical_and(j == 0, k == 0))
    def _():
        m_sc[...] = jnp.full(m_sc.shape, _NEG_INF, dtype=m_sc.dtype)
        l_sc[...] = jnp.zeros_like(l_sc)

    @pl.when(k == 0)
    def _():
        acc_ref[...] = jnp.zeros_like(acc_ref)
        lacc_ref[...] = jnp.zeros_like(lacc_ref)

    start = pl.multiple_of(k * tk, 128)
    w_blk = w_ref[...]
    acc_ref[...] += lax.dot_general(
        h_ref[:, pl.ds(start, tk)], w_blk,
        (((1,), (1,)), ((), ())), preferred_element_type=jnp.float32)
    lacc_ref[...] += lax.dot_general(
        lh_ref[:, pl.ds(start, tk)], w_blk,
        (((1,), (1,)), ((), ())), preferred_element_type=jnp.float32)

    @pl.when(k == nk - 1)
    def _():
        last_ref[...] = lacc_ref[...].astype(last_ref.dtype)
        logits = acc_ref[...]

        @pl.when(j < nj - 1)          # interior vocab tiles: no padded columns
        def _():
            _softmax_update(m_sc, l_sc, logits)

        @pl.when(j == nj - 1)         # last vocab tile: mask padded columns
        def _():
            tn = logits.shape[1]
            col = j * tn + lax.broadcasted_iota(jnp.int32, logits.shape, 1)
            _softmax_update(m_sc, l_sc,
                            jnp.where(col < vocab_size, logits, _NEG_INF))

        @pl.when(j == nj - 1)
        def _():
            _write_stats(stats_ref, m_sc, l_sc)


# ----------------------------------------------------------------------------
# Pallas wrappers
# ----------------------------------------------------------------------------
def pallas_matmul_wt(h, w, tiles=None):
    """h: [T, H], w: [V, H] -> [T, V] = h @ w.T (f32 accumulation)."""
    T, H = h.shape
    V, H2 = w.shape
    assert H == H2
    isz = jnp.dtype(h.dtype).itemsize
    if tiles is None:
        tm, tn, tk, vmem_limit = _choose_tiles(T, V, H, isz, logits_out=True)
    else:
        tm, tn, tk = tiles
        vmem_limit = _vmem_limits()[1]
    Tp, Vp, Hp = _round_up(T, tm), _round_up(V, tn), _round_up(H, tk)
    hp, wp = _pad2d(h, Tp, Hp), _pad2d(w, Vp, Hp)
    grid = (Tp // tm, Vp // tn, Hp // tk)

    out = pl.pallas_call(
        _matmul_kernel,
        out_shape=jax.ShapeDtypeStruct((Tp, Vp), h.dtype),
        grid_spec=pltpu.PrefetchScalarGridSpec(
            num_scalar_prefetch=0,
            grid=grid,
            in_specs=[
                pl.BlockSpec((tm, Hp), lambda i, j, k: (i, 0)),   # resident panel
                _w_spec(tn, tk, grid[1] * grid[2]),
            ],
            out_specs=pl.BlockSpec((tm, tn), lambda i, j, k: (i, j)),
            scratch_shapes=[pltpu.VMEM((tm, tn), jnp.float32)],
        ),
        compiler_params=pltpu.CompilerParams(
            dimension_semantics=("parallel", "parallel", "arbitrary"),
            vmem_limit_bytes=vmem_limit,
        ),
    )(hp, wp)
    return out[:T, :V]


def pallas_matmul_wt_stats(h, w, vocab_size, tiles=None):
    """Fused logits = h @ w.T plus per-row softmax stats.

    Returns (logits [T, V] in h.dtype, m [T] f32, l [T] f32) with
    m[t] = max_v logits_f32[t, v],  l[t] = sum_v exp(logits_f32[t, v] - m[t]).
    """
    T, H = h.shape
    V, H2 = w.shape
    assert H == H2 and V == vocab_size
    isz = jnp.dtype(h.dtype).itemsize
    if tiles is None:
        tm, tn, tk, vmem_limit = _choose_tiles(T, V, H, isz, logits_out=True)
    else:
        tm, tn, tk = tiles
        vmem_limit = _vmem_limits()[1]
    Tp, Vp, Hp = _round_up(T, tm), _round_up(V, tn), _round_up(H, tk)
    hp, wp = _pad2d(h, Tp, Hp), _pad2d(w, Vp, Hp)
    grid = (Tp // tm, Vp // tn, Hp // tk)

    logits, stats = pl.pallas_call(
        partial(_matmul_stats_kernel, vocab_size=vocab_size),
        out_shape=(
            jax.ShapeDtypeStruct((Tp, Vp), h.dtype),
            jax.ShapeDtypeStruct((Tp, 256), jnp.float32),
        ),
        grid_spec=pltpu.PrefetchScalarGridSpec(
            num_scalar_prefetch=0,
            grid=grid,
            in_specs=[
                pl.BlockSpec((tm, Hp), lambda i, j, k: (i, 0)),   # resident panel
                _w_spec(tn, tk, grid[1] * grid[2]),
            ],
            out_specs=[
                pl.BlockSpec((tm, tn), lambda i, j, k: (i, j)),
                pl.BlockSpec((tm, 256), lambda i, j, k: (i, 0)),  # lane-dense stats
            ],
            scratch_shapes=[
                pltpu.VMEM((tm, tn), jnp.float32),
                pltpu.VMEM((tm, 1), jnp.float32),
                pltpu.VMEM((tm, 1), jnp.float32),
            ],
        ),
        compiler_params=pltpu.CompilerParams(
            dimension_semantics=("parallel", "arbitrary", "arbitrary"),
            vmem_limit_bytes=vmem_limit,
        ),
    )(hp, wp)
    return logits[:T, :V], stats[:T, 0], stats[:T, 128]


def pallas_prefill_stats_and_last(h, last_h, w, vocab_size, tiles=None):
    """Fused prefill kernel: softmax stats for every token + last_logits.

    h: [T, H], last_h: [B, H], w: [vocab_size, H].
    Returns (m [T] f32, l [T] f32, last_logits [B, vocab_size] in h.dtype)
    with one single pass over the weight.
    """
    T, H = h.shape
    B, H3 = last_h.shape
    V, H2 = w.shape
    assert H == H2 == H3 and V == vocab_size
    Bp = max(8, _round_up(B, 8))
    isz = jnp.dtype(h.dtype).itemsize
    if tiles is None:
        tm, tn, tk, vmem_limit = _choose_tiles(T, V, H, isz,
                                               logits_out=False, b_rows=Bp)
    else:
        tm, tn, tk = tiles
        vmem_limit = _vmem_limits()[1]
    Tp, Vp, Hp = _round_up(T, tm), _round_up(V, tn), _round_up(H, tk)
    hp, wp = _pad2d(h, Tp, Hp), _pad2d(w, Vp, Hp)
    lhp = _pad2d(last_h, Bp, Hp)
    grid = (Tp // tm, Vp // tn, Hp // tk)

    stats, last = pl.pallas_call(
        partial(_prefill_stats_kernel, vocab_size=vocab_size),
        out_shape=(
            jax.ShapeDtypeStruct((Tp, 256), jnp.float32),
            jax.ShapeDtypeStruct((Bp, Vp), h.dtype),
        ),
        grid_spec=pltpu.PrefetchScalarGridSpec(
            num_scalar_prefetch=0,
            grid=grid,
            in_specs=[
                pl.BlockSpec((tm, Hp), lambda i, j, k: (i, 0)),   # resident panel
                pl.BlockSpec((Bp, Hp), lambda i, j, k: (0, 0)),   # resident last rows
                _w_spec(tn, tk, grid[1] * grid[2]),
            ],
            out_specs=[
                pl.BlockSpec((tm, 256), lambda i, j, k: (i, 0)),  # lane-dense stats
                pl.BlockSpec((Bp, tn), lambda i, j, k: (0, j)),   # last_logits
            ],
            scratch_shapes=[
                pltpu.VMEM((tm, tn), jnp.float32),
                pltpu.VMEM((Bp, tn), jnp.float32),
                pltpu.VMEM((tm, 1), jnp.float32),
                pltpu.VMEM((tm, 1), jnp.float32),
            ],
        ),
        compiler_params=pltpu.CompilerParams(
            # i stays sequential: the last_logits output block ignores i (it is
            # rewritten with identical values every M tile); vocab/K accumulate.
            dimension_semantics=("arbitrary", "arbitrary", "arbitrary"),
            vmem_limit_bytes=vmem_limit,
        ),
    )(hp, lhp, wp)
    return stats[:T, 0], stats[:T, 128], last[:B, :V]


# ----------------------------------------------------------------------------
# Forward pass (glue in plain JAX, hot path in Pallas)
# ----------------------------------------------------------------------------
def logits_processor_forward(input_ids, hidden_states, weight, input_metadata,
                             vocab_size):
    # Fuse the `[:, :vocab_size]` slice into the matmul by slicing weight rows.
    w_v = weight[:vocab_size]

    is_decode = input_metadata.forward_mode != ForwardMode.PREFILL
    last_index = None
    if not is_decode:
        last_index = (
            jnp.cumsum(
                (input_metadata.seq_lens - input_metadata.prefix_lens).astype(
                    jnp.int32)) - 1)

    if not input_metadata.return_logprob:
        last_hidden = hidden_states if is_decode else hidden_states[last_index]
        last_logits = pallas_matmul_wt(last_hidden, w_v)
        return last_logits, (None, None, None)

    if is_decode:
        # decode + logprob: full [B, V] logits are returned, so they are
        # materialized once; the softmax stats come fused from the same weight
        # stream and the log-softmax is a single elementwise (XLA-fused) pass.
        logits, m, l = pallas_matmul_wt_stats(hidden_states, w_v, vocab_size)
        all_logprobs = jnp.log(
            jnp.exp(logits.astype(jnp.float32) - m[:, None]) / l[:, None] + 1e-6)
        return logits, (None, None, all_logprobs)

    # prefill + logprob: never write [T, V] logits/logprobs to HBM.  One fused
    # kernel streams the weight once and emits (m, l) per token plus the [B, V]
    # last_logits.
    # TODO(synk): if B ever grows comparable to the M tile, fall back to a
    # separate last-rows matmul instead of fusing it into every M tile.
    T = hidden_states.shape[0]
    last_hidden = hidden_states[last_index]
    m, l, last_logits = pallas_prefill_stats_and_last(
        hidden_states, last_hidden, w_v, vocab_size)

    next_ids = jnp.concatenate(
        [input_ids[1:], jnp.zeros((1,), dtype=input_ids.dtype)])
    # g[t] = logits[t, next_ids[t]] as a cheap row-wise dot (T*H reads) instead
    # of a per-tile gather epilogue inside the kernel.
    w_next = w_v[next_ids].astype(jnp.float32)                       # [T, H]
    g = jnp.sum(hidden_states.astype(jnp.float32) * w_next, axis=-1)
    # log(softmax(logits)[t, next_id] + 1e-6)
    prefill_logprobs = jnp.log(jnp.exp(g - m) / l + 1e-6)

    m_last = m[last_index][:, None]
    l_last = l[last_index][:, None]
    last_logprobs = jnp.log(
        jnp.exp(last_logits.astype(jnp.float32) - m_last) / l_last + 1e-6)

    logprobs_cumsum = jnp.cumsum(prefill_logprobs, dtype=jnp.float32)
    start = jnp.clip(input_metadata.extend_start_loc, 0, T - 1)
    end = jnp.clip(
        input_metadata.extend_start_loc + input_metadata.extend_seq_lens - 2,
        0, T - 1)
    sum_logp = (logprobs_cumsum[end] - logprobs_cumsum[start]
                + prefill_logprobs[start])
    normalized_logprobs = sum_logp / jnp.maximum(
        input_metadata.extend_seq_lens - 1, 1).astype(jnp.float32)

    return last_logits, (prefill_logprobs, normalized_logprobs, last_logprobs)


# ----------------------------------------------------------------------------
# Reference (plain JAX) for correctness checking
# ----------------------------------------------------------------------------
def _ref_forward(input_ids, hidden_states, weight, meta, vocab_size):
    is_decode = meta.forward_mode != ForwardMode.PREFILL
    if not is_decode:
        last_index = jnp.cumsum(meta.seq_lens - meta.prefix_lens) - 1
    if not meta.return_logprob:
        last_hidden = hidden_states if is_decode else hidden_states[last_index]
        last_logits = (last_hidden @ weight.T)[:, :vocab_size]
        return last_logits, (None, None, None)
    logits = (hidden_states @ weight.T)[:, :vocab_size]
    all_logprobs = jnp.log(
        jax.nn.softmax(logits.astype(jnp.float32), axis=-1) + 1e-6)
    if is_decode:
        return logits, (None, None, all_logprobs)
    last_logits = logits[last_index]
    last_logprobs = all_logprobs[last_index]
    T = all_logprobs.shape[0]
    next_ids = jnp.concatenate([input_ids[1:], jnp.zeros((1,), input_ids.dtype)])
    prefill_logprobs = all_logprobs[jnp.arange(T), next_ids]
    cs = jnp.cumsum(prefill_logprobs, dtype=jnp.float32)
    start = jnp.clip(meta.extend_start_loc, 0, T - 1)
    end = jnp.clip(meta.extend_start_loc + meta.extend_seq_lens - 2, 0, T - 1)
    sum_logp = cs[end] - cs[start] + prefill_logprobs[start]
    normalized = sum_logp / jnp.maximum(meta.extend_seq_lens - 1, 1).astype(
        jnp.float32)
    return last_logits, (prefill_logprobs, normalized, last_logprobs)


if __name__ == "__main__":
    key = jax.random.PRNGKey(0)
    k1, k2, k3, k4 = jax.random.split(key, 4)

    # Small shapes: 2 sequences, 14 extend tokens, hidden=640 (exercises K
    # tiling + K zero-padding), padded weight vocab=320, real vocab_size=250
    # (exercises vocab-column masking), T=14 (exercises row padding).
    T, H = 14, 640
    V_PAD, VOCAB_SIZE = 320, 250
    BATCH = 2

    hidden_states = jax.random.normal(k1, (T, H), jnp.float32) * 0.1
    weight = jax.random.normal(k2, (V_PAD, H), jnp.float32) * 0.1
    input_ids = jax.random.randint(k3, (T,), 0, VOCAB_SIZE, dtype=jnp.int32)

    seq_lens = jnp.array([9, 5], jnp.int32)
    prefix_lens = jnp.zeros((BATCH,), jnp.int32)
    extend_start_loc = jnp.array([0, 9], jnp.int32)
    extend_seq_lens = jnp.array([9, 5], jnp.int32)

    meta_prefill_lp = InputMetadata(ForwardMode.PREFILL, seq_lens, prefix_lens,
                                    True, extend_start_loc, extend_seq_lens)
    meta_prefill = InputMetadata(ForwardMode.PREFILL, seq_lens, prefix_lens,
                                 False, extend_start_loc, extend_seq_lens)
    meta_decode_lp = InputMetadata(ForwardMode.DECODE, seq_lens, prefix_lens,
                                   True, extend_start_loc, extend_seq_lens)
    meta_decode = InputMetadata(ForwardMode.DECODE, seq_lens, prefix_lens,
                                False, extend_start_loc, extend_seq_lens)

    tol = dict(rtol=1e-3, atol=1e-3)

    # --- prefill + return_logprob=True (fused stats + last_logits kernel)
    last_logits, (prefill_lp, norm_lp, last_lp) = logits_processor_forward(
        input_ids, hidden_states, weight, meta_prefill_lp, VOCAB_SIZE)
    jax.block_until_ready((last_logits, prefill_lp, norm_lp, last_lp))
    r_last_logits, (r_prefill_lp, r_norm_lp, r_last_lp) = _ref_forward(
        input_ids, hidden_states, weight, meta_prefill_lp, VOCAB_SIZE)
    assert last_logits.shape == (BATCH, VOCAB_SIZE)
    assert prefill_lp.shape == (T,)
    assert norm_lp.shape == (BATCH,)
    assert last_lp.shape == (BATCH, VOCAB_SIZE)
    assert jnp.allclose(last_logits, r_last_logits, **tol)
    assert jnp.allclose(prefill_lp, r_prefill_lp, **tol)
    assert jnp.allclose(norm_lp, r_norm_lp, **tol)
    assert jnp.allclose(last_lp, r_last_lp, **tol)

    # --- prefill + return_logprob=False (matmul-only on last rows)
    pf_logits, _ = logits_processor_forward(
        input_ids, hidden_states, weight, meta_prefill, VOCAB_SIZE)
    jax.block_until_ready(pf_logits)
    r_pf_logits, _ = _ref_forward(
        input_ids, hidden_states, weight, meta_prefill, VOCAB_SIZE)
    assert pf_logits.shape == (BATCH, VOCAB_SIZE)
    assert jnp.allclose(pf_logits, r_pf_logits, **tol)

    # --- decode paths
    decode_hidden = jax.random.normal(k4, (BATCH, H), jnp.float32) * 0.1
    d_logits, _ = logits_processor_forward(
        None, decode_hidden, weight, meta_decode, VOCAB_SIZE)
    jax.block_until_ready(d_logits)
    r_d_logits, _ = _ref_forward(
        None, decode_hidden, weight, meta_decode, VOCAB_SIZE)
    assert d_logits.shape == (BATCH, VOCAB_SIZE)
    assert jnp.allclose(d_logits, r_d_logits, **tol)

    dlp_logits, (_, _, dlp_all) = logits_processor_forward(
        None, decode_hidden, weight, meta_decode_lp, VOCAB_SIZE)
    jax.block_until_ready((dlp_logits, dlp_all))
    r_dlp_logits, (_, _, r_dlp_all) = _ref_forward(
        None, decode_hidden, weight, meta_decode_lp, VOCAB_SIZE)
    assert jnp.allclose(dlp_logits, r_dlp_logits, **tol)
    assert jnp.allclose(dlp_all, r_dlp_all, **tol)

    # --- force multiple M/N/K tiles to exercise online-softmax accumulation
    #     across vocab/hidden grid axes, the last-tile-only vocab mask, and the
    #     fused last_logits output being rewritten across M tiles.
    w_v = weight[:VOCAB_SIZE]
    last_idx = jnp.cumsum(seq_lens - prefix_lens) - 1
    ref_logits = (hidden_states @ w_v.T).astype(jnp.float32)
    r_m = jnp.max(ref_logits, axis=-1)
    r_l = jnp.sum(jnp.exp(ref_logits - r_m[:, None]), axis=-1)

    m_s, l_s, last_s = pallas_prefill_stats_and_last(
        hidden_states, hidden_states[last_idx], w_v, VOCAB_SIZE,
        tiles=(8, 128, 128))
    jax.block_until_ready((m_s, l_s, last_s))
    assert jnp.allclose(m_s, r_m, **tol)
    assert jnp.allclose(l_s, r_l, **tol)
    assert jnp.allclose(last_s, ref_logits[last_idx], **tol)

    lg_s, m_d, l_d = pallas_matmul_wt_stats(
        decode_hidden, w_v, VOCAB_SIZE, tiles=(8, 128, 128))
    jax.block_until_ready((lg_s, m_d, l_d))
    ref_dec = (decode_hidden @ w_v.T).astype(jnp.float32)
    assert jnp.allclose(lg_s, ref_dec, **tol)
    assert jnp.allclose(m_d, jnp.max(ref_dec, axis=-1), **tol)
    assert jnp.allclose(
        l_d, jnp.sum(jnp.exp(ref_dec - jnp.max(ref_dec, -1)[:, None]), -1), **tol)

    mm_s = pallas_matmul_wt(hidden_states, w_v, tiles=(8, 128, 128))
    jax.block_until_ready(mm_s)
    assert jnp.allclose(mm_s, ref_logits.astype(mm_s.dtype), **tol)

    print("KERNEL_OK")
</pallas_src>

<mosaic_0001>
module attributes {stable_mosaic.version = 11 : i64} {
  func.func @_prefill_stats_kernel(%arg0: i32, %arg1: i32, %arg2: i32, %arg3: memref<16x1024xf32, #tpu.memory_space<vmem>>, %arg4: memref<8x1024xf32, #tpu.memory_space<vmem>>, %arg5: memref<256x512xf32, #tpu.memory_space<vmem>>, %arg6: memref<16x256xf32, #tpu.memory_space<vmem>>, %arg7: memref<8x256xf32, #tpu.memory_space<vmem>>, %arg8: memref<16x256xf32, #tpu.memory_space<vmem>>, %arg9: memref<8x256xf32, #tpu.memory_space<vmem>>, %arg10: memref<16x1xf32, #tpu.memory_space<vmem>>, %arg11: memref<16x1xf32, #tpu.memory_space<vmem>>) attributes {dimension_semantics = [#tpu.dimension_semantics<arbitrary>, #tpu.dimension_semantics<arbitrary>, #tpu.dimension_semantics<arbitrary>], iteration_bounds = array<i64: 1, 1, 2>, scalar_prefetch = 0 : i64, scratch_operands = 4 : i64, tpu.core_type = #tpu.core_type<tc>, window_params = [{transform_indices = @transform_0, window_bounds = array<i64: 16, 1024>}, {pipeline_mode = #tpu.pipeline_mode<synchronous>, transform_indices = @transform_1, window_bounds = array<i64: 8, 1024>}, {transform_indices = @transform_2, window_bounds = array<i64: 256, 512>}, {transform_indices = @transform_3, window_bounds = array<i64: 16, 256>}, {transform_indices = @transform_4, window_bounds = array<i64: 8, 256>}]} {
    %c0_i32 = arith.constant 0 : i32
    %0 = arith.cmpi eq, %arg1, %c0_i32 : i32
    %c0_i32_0 = arith.constant 0 : i32
    %1 = arith.cmpi eq, %arg2, %c0_i32_0 : i32
    %2 = arith.andi %0, %1 : i1
    %3 = arith.extui %2 : i1 to i32
    %c0_i32_1 = arith.constant 0 : i32
    %4 = arith.cmpi ne, %3, %c0_i32_1 : i32
    scf.if %4 {
      %cst_17 = arith.constant -1.000000e+30 : f32
      %26 = vector.broadcast %cst_17 : f32 to vector<16x1xf32>
      %c0_18 = arith.constant 0 : index
      %c0_19 = arith.constant 0 : index
      %27 = vector.load %arg10[%c0_18, %c0_19] : memref<16x1xf32, #tpu.memory_space<vmem>>, vector<16x1xf32>
      tpu.vector_store %arg10[%c0_18, %c0_19], %26 {strides = array<i32>} : memref<16x1xf32, #tpu.memory_space<vmem>>, vector<16x1xf32>,
      %cst_20 = arith.constant 0.000000e+00 : f32
      %28 = vector.broadcast %cst_20 : f32 to vector<16x1xf32>
      %c0_21 = arith.constant 0 : index
      %c0_22 = arith.constant 0 : index
      %29 = vector.load %arg11[%c0_21, %c0_22] : memref<16x1xf32, #tpu.memory_space<vmem>>, vector<16x1xf32>
      tpu.vector_store %arg11[%c0_21, %c0_22], %28 {strides = array<i32>} : memref<16x1xf32, #tpu.memory_space<vmem>>, vector<16x1xf32>,
    } else {
    }
    %c0_i32_2 = arith.constant 0 : i32
    %5 = arith.cmpi eq, %arg2, %c0_i32_2 : i32
    %6 = arith.extui %5 : i1 to i32
    %c0_i32_3 = arith.constant 0 : i32
    %7 = arith.cmpi ne, %6, %c0_i32_3 : i32
    scf.if %7 {
      %cst_17 = arith.constant 0.000000e+00 : f32
      %26 = vector.broadcast %cst_17 : f32 to vector<16x256xf32>
      %c0_18 = arith.constant 0 : index
      %c0_19 = arith.constant 0 : index
      %27 = vector.load %arg8[%c0_18, %c0_19] : memref<16x256xf32, #tpu.memory_space<vmem>>, vector<16x256xf32>
      tpu.vector_store %arg8[%c0_18, %c0_19], %26 {strides = array<i32>} : memref<16x256xf32, #tpu.memory_space<vmem>>, vector<16x256xf32>,
      %cst_20 = arith.constant 0.000000e+00 : f32
      %28 = vector.broadcast %cst_20 : f32 to vector<8x256xf32>
      %c0_21 = arith.constant 0 : index
      %c0_22 = arith.constant 0 : index
      %29 = vector.load %arg9[%c0_21, %c0_22] : memref<8x256xf32, #tpu.memory_space<vmem>>, vector<8x256xf32>
      tpu.vector_store %arg9[%c0_21, %c0_22], %28 {strides = array<i32>} : memref<8x256xf32, #tpu.memory_space<vmem>>, vector<8x256xf32>,
    } else {
    }
    %c512_i32 = arith.constant 512 : i32
    %8 = arith.muli %arg2, %c512_i32 : i32
    %9 = tpu.assume_multiple %8, 128 : i32
    %c0 = arith.constant 0 : index
    %c0_4 = arith.constant 0 : index
    %10 = vector.load %arg5[%c0, %c0_4] : memref<256x512xf32, #tpu.memory_space<vmem>>, vector<256x512xf32>
    %c0_5 = arith.constant 0 : index
    %c0_6 = arith.constant 0 : index
    %11 = vector.load %arg8[%c0_5, %c0_6] : memref<16x256xf32, #tpu.memory_space<vmem>>, vector<16x256xf32>
    %c0_7 = arith.constant 0 : index
    %12 = arith.index_cast %9 : i32 to index
    %13 = vector.load %arg3[%c0_7, %12] : memref<16x1024xf32, #tpu.memory_space<vmem>>, vector<16x512xf32>
    %cst = arith.constant dense<0.000000e+00> : vector<16x256xf32>
    %14 = tpu.matmul %13, %10, %cst {dimension_numbers = #tpu.dot_dimension_numbers<[1], [1], [0], [0], [0, 0, 1, 0], [], []>} : vector<16x512xf32>, vector<256x512xf32>, vector<16x256xf32> -> vector<16x256xf32>
    %15 = arith.addf %11, %14 : vector<16x256xf32>
    %c0_8 = arith.constant 0 : index
    %c0_9 = arith.constant 0 : index
    %16 = vector.load %arg8[%c0_8, %c0_9] : memref<16x256xf32, #tpu.memory_space<vmem>>, vector<16x256xf32>
    tpu.vector_store %arg8[%c0_8, %c0_9], %15 {strides = array<i32>} : memref<16x256xf32, #tpu.memory_space<vmem>>, vector<16x256xf32>,
    %c0_10 = arith.constant 0 : index
    %c0_11 = arith.constant 0 : index
    %17 = vector.load %arg9[%c0_10, %c0_11] : memref<8x256xf32, #tpu.memory_space<vmem>>, vector<8x256xf32>
    %c0_12 = arith.constant 0 : index
    %18 = arith.index_cast %9 : i32 to index
    %19 = vector.load %arg4[%c0_12, %18] : memref<8x1024xf32, #tpu.memory_space<vmem>>, vector<8x512xf32>
    %cst_13 = arith.constant dense<0.000000e+00> : vector<8x256xf32>
    %20 = tpu.matmul %19, %10, %cst_13 {dimension_numbers = #tpu.dot_dimension_numbers<[1], [1], [0], [0], [0, 0, 1, 0], [], []>} : vector<8x512xf32>, vector<256x512xf32>, vector<8x256xf32> -> vector<8x256xf32>
    %21 = arith.addf %17, %20 : vector<8x256xf32>
    %c0_14 = arith.constant 0 : index
    %c0_15 = arith.constant 0 : index
    %22 = vector.load %arg9[%c0_14, %c0_15] : memref<8x256xf32, #tpu.memory_space<vmem>>, vector<8x256xf32>
    tpu.vector_store %arg9[%c0_14, %c0_15], %21 {strides = array<i32>} : memref<8x256xf32, #tpu.memory_space<vmem>>, vector<8x256xf32>,
    %c1_i32 = arith.constant 1 : i32
    %23 = arith.cmpi eq, %arg2, %c1_i32 : i32
    %24 = arith.extui %23 : i1 to i32
    %c0_i32_16 = arith.constant 0 : i32
    %25 = arith.cmpi ne, %24, %c0_i32_16 : i32
    scf.if %25 {
      %c0_17 = arith.constant 0 : index
      %c0_18 = arith.constant 0 : index
      %26 = vector.load %arg9[%c0_17, %c0_18] : memref<8x256xf32, #tpu.memory_space<vmem>>, vector<8x256xf32>
      %c0_19 = arith.constant 0 : index
      %c0_20 = arith.constant 0 : index
      %27 = vector.load %arg7[%c0_19, %c0_20] : memref<8x256xf32, #tpu.memory_space<vmem>>, vector<8x256xf32>
      tpu.vector_store %arg7[%c0_19, %c0_20], %26 {strides = array<i32>} : memref<8x256xf32, #tpu.memory_space<vmem>>, vector<8x256xf32>,
      %c0_21 = arith.constant 0 : index
      %c0_22 = arith.constant 0 : index
      %28 = vector.load %arg8[%c0_21, %c0_22] : memref<16x256xf32, #tpu.memory_space<vmem>>, vector<16x256xf32>
      %c0_i32_23 = arith.constant 0 : i32
      %29 = arith.cmpi slt, %arg1, %c0_i32_23 : i32
      %30 = arith.extui %29 : i1 to i32
      %c0_i32_24 = arith.constant 0 : i32
      %31 = arith.cmpi ne, %30, %c0_i32_24 : i32
      scf.if %31 {
        %c0_29 = arith.constant 0 : index
        %c0_30 = arith.constant 0 : index
        %38 = vector.load %arg10[%c0_29, %c0_30] : memref<16x1xf32, #tpu.memory_space<vmem>>, vector<16x1xf32>
        %cst_31 = arith.constant dense<0xFF800000> : vector<16xf32>
        %39 = vector.multi_reduction <maximumf>, %28, %cst_31 [1] : vector<16x256xf32> to vector<16xf32>
        %40 = vector.shape_cast %39 : vector<16xf32> to vector<16x1xf32>
        %41 = arith.maximumf %38, %40 : vector<16x1xf32>
        %42 = arith.subf %38, %41 : vector<16x1xf32>
        %43 = math.exp %42 : vector<16x1xf32>
        %c0_32 = arith.constant 0 : index
        %c0_33 = arith.constant 0 : index
        %44 = vector.load %arg11[%c0_32, %c0_33] : memref<16x1xf32, #tpu.memory_space<vmem>>, vector<16x1xf32>
        %45 = arith.mulf %43, %44 : vector<16x1xf32>
        %46 = vector.broadcast %41 : vector<16x1xf32> to vector<16x256xf32>
        %47 = arith.subf %28, %46 : vector<16x256xf32>
        %48 = math.exp %47 : vector<16x256xf32>
        %cst_34 = arith.constant dense<0.000000e+00> : vector<16xf32>
        %49 = vector.multi_reduction <add>, %48, %cst_34 [1] : vector<16x256xf32> to vector<16xf32>
        %50 = vector.shape_cast %49 : vector<16xf32> to vector<16x1xf32>
        %51 = arith.addf %45, %50 : vector<16x1xf32>
        %c0_35 = arith.constant 0 : index
        %c0_36 = arith.constant 0 : index
        %52 = vector.load %arg11[%c0_35, %c0_36] : memref<16x1xf32, #tpu.memory_space<vmem>>, vector<16x1xf32>
        tpu.vector_store %arg11[%c0_35, %c0_36], %51 {strides = array<i32>} : memref<16x1xf32, #tpu.memory_space<vmem>>, vector<16x1xf32>,
        %c0_37 = arith.constant 0 : index
        %c0_38 = arith.constant 0 : index
        %53 = vector.load %arg10[%c0_37, %c0_38] : memref<16x1xf32, #tpu.memory_space<vmem>>, vector<16x1xf32>
        tpu.vector_store %arg10[%c0_37, %c0_38], %41 {strides = array<i32>} : memref<16x1xf32, #tpu.memory_space<vmem>>, vector<16x1xf32>,
      } else {
      }
      %c0_i32_25 = arith.constant 0 : i32
      %32 = arith.cmpi eq, %arg1, %c0_i32_25 : i32
      %33 = arith.extui %32 : i1 to i32
      %c0_i32_26 = arith.constant 0 : i32
      %34 = arith.cmpi ne, %33, %c0_i32_26 : i32
      scf.if %34 {
        %c256_i32 = arith.constant 256 : i32
        %38 = arith.muli %arg1, %c256_i32 : i32
        %39 = tpu.iota {dimensions = array<i32: 1>} : vector<16x256xi32>
        %40 = vector.broadcast %38 : i32 to vector<16x256xi32>
        %41 = arith.addi %40, %39 : vector<16x256xi32>
        %c250_i32 = arith.constant 250 : i32
        %42 = vector.broadcast %c250_i32 : i32 to vector<16x256xi32>
        %43 = arith.cmpi slt, %41, %42 : vector<16x256xi32>
        %cst_29 = arith.constant -1.000000e+30 : f32
        %44 = vector.broadcast %cst_29 : f32 to vector<16x256xf32>
        %45 = arith.select %43, %28, %44 : vector<16x256xi1>, vector<16x256xf32>
        %c0_30 = arith.constant 0 : index
        %c0_31 = arith.constant 0 : index
        %46 = vector.load %arg10[%c0_30, %c0_31] : memref<16x1xf32, #tpu.memory_space<vmem>>, vector<16x1xf32>
        %cst_32 = arith.constant dense<0xFF800000> : vector<16xf32>
        %47 = vector.multi_reduction <maximumf>, %45, %cst_32 [1] : vector<16x256xf32> to vector<16xf32>
        %48 = vector.shape_cast %47 : vector<16xf32> to vector<16x1xf32>
        %49 = arith.maximumf %46, %48 : vector<16x1xf32>
        %50 = arith.subf %46, %49 : vector<16x1xf32>
        %51 = math.exp %50 : vector<16x1xf32>
        %c0_33 = arith.constant 0 : index
        %c0_34 = arith.constant 0 : index
        %52 = vector.load %arg11[%c0_33, %c0_34] : memref<16x1xf32, #tpu.memory_space<vmem>>, vector<16x1xf32>
        %53 = arith.mulf %51, %52 : vector<16x1xf32>
        %54 = vector.broadcast %49 : vector<16x1xf32> to vector<16x256xf32>
        %55 = arith.subf %45, %54 : vector<16x256xf32>
        %56 = math.exp %55 : vector<16x256xf32>
        %cst_35 = arith.constant dense<0.000000e+00> : vector<16xf32>
        %57 = vector.multi_reduction <add>, %56, %cst_35 [1] : vector<16x256xf32> to vector<16xf32>
        %58 = vector.shape_cast %57 : vector<16xf32> to vector<16x1xf32>
        %59 = arith.addf %53, %58 : vector<16x1xf32>
        %c0_36 = arith.constant 0 : index
        %c0_37 = arith.constant 0 : index
        %60 = vector.load %arg11[%c0_36, %c0_37] : memref<16x1xf32, #tpu.memory_space<vmem>>, vector<16x1xf32>
        tpu.vector_store %arg11[%c0_36, %c0_37], %59 {strides = array<i32>} : memref<16x1xf32, #tpu.memory_space<vmem>>, vector<16x1xf32>,
        %c0_38 = arith.constant 0 : index
        %c0_39 = arith.constant 0 : index
        %61 = vector.load %arg10[%c0_38, %c0_39] : memref<16x1xf32, #tpu.memory_space<vmem>>, vector<16x1xf32>
        tpu.vector_store %arg10[%c0_38, %c0_39], %49 {strides = array<i32>} : memref<16x1xf32, #tpu.memory_space<vmem>>, vector<16x1xf32>,
      } else {
      }
      %c0_i32_27 = arith.constant 0 : i32
      %35 = arith.cmpi eq, %arg1, %c0_i32_27 : i32
      %36 = arith.extui %35 : i1 to i32
      %c0_i32_28 = arith.constant 0 : i32
      %37 = arith.cmpi ne, %36, %c0_i32_28 : i32
      scf.if %37 {
        %c0_29 = arith.constant 0 : index
        %c0_30 = arith.constant 0 : index
        %38 = vector.load %arg10[%c0_29, %c0_30] : memref<16x1xf32, #tpu.memory_space<vmem>>, vector<16x1xf32>
        %39 = vector.shape_cast %38 : vector<16x1xf32> to vector<16x1xf32>
        %40 = vector.broadcast %39 : vector<16x1xf32> to vector<16x128xf32>
        %c0_31 = arith.constant 0 : index
        %c0_32 = arith.constant 0 : index
        %41 = vector.load %arg6[%c0_31, %c0_32] : memref<16x256xf32, #tpu.memory_space<vmem>>, vector<16x128xf32>
        tpu.vector_store %arg6[%c0_31, %c0_32], %40 {strides = array<i32>} : memref<16x256xf32, #tpu.memory_space<vmem>>, vector<16x128xf32>,
        %c0_33 = arith.constant 0 : index
        %c0_34 = arith.constant 0 : index
        %42 = vector.load %arg11[%c0_33, %c0_34] : memref<16x1xf32, #tpu.memory_space<vmem>>, vector<16x1xf32>
        %43 = vector.shape_cast %42 : vector<16x1xf32> to vector<16x1xf32>
        %44 = vector.broadcast %43 : vector<16x1xf32> to vector<16x128xf32>
        %c0_35 = arith.constant 0 : index
        %c128 = arith.constant 128 : index
        %45 = vector.load %arg6[%c0_35, %c128] : memref<16x256xf32, #tpu.memory_space<vmem>>, vector<16x128xf32>
        tpu.vector_store %arg6[%c0_35, %c128], %44 {strides = array<i32>} : memref<16x256xf32, #tpu.memory_space<vmem>>, vector<16x128xf32>,
      } else {
      }
    } else {
    }
    return
  }
  func.func @transform_0(%arg0: i32, %arg1: i32, %arg2: i32) -> (i32, i32) {
    %c0_i32 = arith.constant 0 : i32
    %c0_i32_0 = arith.constant 0 : i32
    return %arg0, %c0_i32 : i32, i32
  }
  func.func @transform_1(%arg0: i32, %arg1: i32, %arg2: i32) -> (i32, i32) {
    %c0_i32 = arith.constant 0 : i32
    %c0_i32_0 = arith.constant 0 : i32
    %c0_i32_1 = arith.constant 0 : i32
    return %c0_i32, %c0_i32_0 : i32, i32
  }
  func.func @transform_2(%arg0: i32, %arg1: i32, %arg2: i32) -> (i32, i32) {
    %c0_i32 = arith.constant 0 : i32
    return %arg1, %arg2 : i32, i32
  }
  func.func @transform_3(%arg0: i32, %arg1: i32, %arg2: i32) -> (i32, i32) {
    %c0_i32 = arith.constant 0 : i32
    %c0_i32_0 = arith.constant 0 : i32
    return %arg0, %c0_i32 : i32, i32
  }
  func.func @transform_4(%arg0: i32, %arg1: i32, %arg2: i32) -> (i32, i32) {
    %c0_i32 = arith.constant 0 : i32
    %c0_i32_0 = arith.constant 0 : i32
    return %c0_i32, %arg1 : i32, i32
  }
}

</mosaic_0001>

<llo_original>
// kernel: tpu_custom_call.1
$region0: #{tpu_custom_call.1}
  #allocation0 [shape = 'u32[]', space=smem, size = 0x4, offset = 0x4, fixed_abs, tag = 'smem constant byte address 0x4 - core index']
  #allocation1 [shape = 'u32[144,128]{1,0:T(1,128)}', space=vmem, size = 0x12000, scoped, tag = 'internal scratch']
  #allocation2 [shape = 'f32[16,256]{1,0:T(8,128)}', space=vmem, size = 0x4000, scoped, tag = 'scratch operand']
  #allocation3 [shape = 'f32[8,256]{1,0:T(8,128)}', space=vmem, size = 0x2000, scoped, tag = 'scratch operand']
  #allocation4 [shape = 'f32[16,1]{1,0:T(8,128)}', space=vmem, size = 0x2000, scoped, tag = 'scratch operand']
  #allocation5 [shape = 'f32[16,1]{1,0:T(8,128)}', space=vmem, size = 0x2000, scoped, tag = 'scratch operand']
  %s0 = inlined_call_operand.hbm [shape: f32[16,1024], index: 0, kind: input, shape index: {}]
  %s1 = inlined_call_operand.hbm [shape: f32[8,1024], index: 1, kind: input, shape index: {}]
  %s2 = inlined_call_operand.hbm [shape: f32[256,1024], index: 2, kind: input, shape index: {}]
  %s3 = inlined_call_operand.hbm [shape: f32[16,256], index: 3, kind: output, shape index: {0}]
  %s4 = inlined_call_operand.hbm [shape: f32[8,256], index: 4, kind: output, shape index: {1}]
  %5 = xla_tuple %s3, %s4
  %s6 = sld [smem:[#allocation0]]
  $region85: #{tpu_custom_call.1} parent=0
    _
  %s8 = ssub.s32 1, %s6
  %s9 = scalar_select 0, %s8, %s6
  $region1: #{tpu_custom_call.1} parent=0
    #allocation6 [shape = 'u8[65536]{0}', space=vmem, size = 0x10000, scoped, tag = 'input window, operand 0, single buffered']
    #allocation7 [shape = 's32[2]{0}', space=sflag, size = 0x8, scoped, tag = 'scoped memory for tpu_custom_call.1']
    #allocation8 [shape = 's32[2]{0}', space=sflag, size = 0x8, scoped, tag = 'scoped memory for tpu_custom_call.1']
    #allocation9 [shape = 'u8[32768]{0}', space=vmem, size = 0x8000, scoped, tag = 'input window, operand 1, single buffered']
    #allocation10 [shape = 's32[1]{0}', space=sflag, size = 0x4, scoped, tag = 'scoped memory for tpu_custom_call.1']
    #allocation11 [shape = 'u8[1048576]{0}', space=vmem, size = 0x100000, scoped, tag = 'input window, operand 2']
    #allocation12 [shape = 'u8[16384]{0}', space=vmem, size = 0x4000, scoped, tag = 'output window, operand 0, single buffered']
    #allocation13 [shape = 'u8[8192]{0}', space=vmem, size = 0x2000, scoped, tag = 'output window, operand 1, single buffered']
    #allocation14 [shape = 's32[1]{0}', space=sflag, size = 0x4, scoped, tag = 'scoped memory for tpu_custom_call.1']
    %10 = vsyncpa [#allocation7], 0
    %11 = vsyncpa [#allocation10], 0
    %12 = vsyncpa [#allocation8], 0
    %13 = vsyncpa [#allocation14], 0
    loop: start=0, step=1, limit=4
    $region2: #{tpu_custom_call.1} parent=1 // loop_pre_header
      _
    $region3: #{tpu_custom_call.1} parent=1 // loop_header
      %s15 = sphi 0, %s19
      %p16 = scmp.ge.s32.totalorder %s15, 4
      %s22 = sphi 0, %s41
      %s23 = sphi 0, %s37
      %s24 = sphi 0, %s33
      %s25 = sphi 0, %s22
      %s26 = sphi 0, %s23
      %s27 = sphi 0, %s24
      %s28 = sphi 0, %s25
      %s29 = sphi 0, %s26
      %s30 = sphi 0, %s27
      %s44 = sphi 0, %s46
      %s47 = sphi 0, %s44
      %s48 = sphi 0, %s47
      %s64 = sphi 0, %s48
      %s68 = sphi 0, %s68
      %s70 = sphi 0, %s68
      %s71 = sphi 0, %s70
      %s85 = sphi 0, %s71
      %s93 = sphi 0, %s95
      %s96 = sphi 0, %s93
      %s97 = sphi 0, %s96
      %s113 = sphi 0, %s97
      %s119 = sphi 0, %s121
      %s122 = sphi 0, %s119
      %s123 = sphi 0, %s122
      %s139 = sphi 0, %s123
      %s145 = sphi 0, %s147
      %s148 = sphi 0, %s145
      %s149 = sphi 0, %s148
      %s165 = sphi 0, %s149
    $region4: #{tpu_custom_call.1} parent=1 // loop_header_branch
      %18 = sbr.rel (%p16) target = $region8
    $region5: #{tpu_custom_call.1} parent=1 // loop_body
      %s20 = ssub.s32 %s15, 1
      %s21 = ssub.s32 %s15, 2
      %s31 = sadd.s32 1, %s24
      %p32 = scmp.ge.s32.totalorder %s31, 2
      %s33 = scalar_select %p32, 0, %s31
      %s34 = sadd.s32 1, %s23
      %s35 = scalar_select %p32, %s34, %s23
      %p36 = scmp.ge.s32.totalorder %s35, 1
      %s37 = scalar_select %p36, 0, %s35
      %s38 = sadd.s32 1, %s22
      %s39 = scalar_select %p36, %s38, %s22
      %p40 = scmp.ge.s32.totalorder %s39, 1
      %s41 = scalar_select %p40, 0, %s39
      %s42 = ssub.s32 %s22, %s41
      %p43 = scmp.eq.s32.totalorder %s42, 0
      %s45 = sadd.s32 %s44, 1
      %s46 = scalar_select %p43, %s44, %s45
      %p49 = pneg %p43
      %p50 = scmp.eq.s32.totalorder %s15, 1
      %p51 = por %p49, %p50
      %p52 = scmp.ne.s32.totalorder %s44, %s47
      %p53 = scmp.eq.s32.totalorder %s15, 0
      %p54 = por %p52, %p53
      %p55 = scmp.ne.s32.totalorder %s44, %s47
      %p56 = scmp.eq.s32.totalorder %s20, 1
      %p57 = por %p55, %p56
      %p58 = scmp.ne.s32.totalorder %s47, %s48
      %p59 = scmp.eq.s32.totalorder %s20, 0
      %p60 = por %p58, %p59
      %p61 = scmp.ne.s32.totalorder %s47, %s48
      %p62 = scmp.eq.s32.totalorder %s21, 1
      %p63 = por %p61, %p62
      %p65 = scmp.ne.s32.totalorder %s48, %s64
      %p66 = scmp.eq.s32.totalorder %s21, 0
      %p67 = por %p65, %p66
      %s69 = sadd.s32 %s68, 1
      %p72 = scmp.eq.s32.totalorder %s15, 1
      %p73 = scmp.ne.s32.totalorder %s68, %s70
      %p74 = scmp.eq.s32.totalorder %s15, 0
      %p75 = por %p73, %p74
      %p76 = scmp.ne.s32.totalorder %s68, %s70
      %p77 = scmp.eq.s32.totalorder %s20, 1
      %p78 = por %p76, %p77
      %p79 = scmp.ne.s32.totalorder %s70, %s71
      %p80 = scmp.eq.s32.totalorder %s20, 0
      %p81 = por %p79, %p80
      %p82 = scmp.ne.s32.totalorder %s70, %s71
      %p83 = scmp.eq.s32.totalorder %s21, 1
      %p84 = por %p82, %p83
      %p86 = scmp.ne.s32.totalorder %s71, %s85
      %p87 = scmp.eq.s32.totalorder %s21, 0
      %p88 = por %p86, %p87
      %s89 = ssub.s32 %s23, %s37
      %s90 = ssub.s32 %s24, %s33
      %s91 = sor.u32 %s89, %s90
      %p92 = scmp.eq.s32.totalorder %s91, 0
      %s94 = sadd.s32 %s93, 1
      %s95 = scalar_select %p92, %s93, %s94
      %p98 = pneg %p92
      %p99 = scmp.eq.s32.totalorder %s15, 1
      %p100 = por %p98, %p99
      %p101 = scmp.ne.s32.totalorder %s93, %s96
      %p102 = scmp.eq.s32.totalorder %s15, 0
      %p103 = por %p101, %p102
      %p104 = scmp.ne.s32.totalorder %s93, %s96
      %p105 = scmp.eq.s32.totalorder %s20, 1
      %p106 = por %p104, %p105
      %p107 = scmp.ne.s32.totalorder %s96, %s97
      %p108 = scmp.eq.s32.totalorder %s20, 0
      %p109 = por %p107, %p108
      %p110 = scmp.ne.s32.totalorder %s96, %s97
      %p111 = scmp.eq.s32.totalorder %s21, 1
      %p112 = por %p110, %p111
      %p114 = scmp.ne.s32.totalorder %s97, %s113
      %p115 = scmp.eq.s32.totalorder %s21, 0
      %p116 = por %p114, %p115
      %s117 = ssub.s32 %s22, %s41
      %p118 = scmp.eq.s32.totalorder %s117, 0
      %s120 = sadd.s32 %s119, 1
      %s121 = scalar_select %p118, %s119, %s120
      %p124 = pneg %p118
      %p125 = scmp.eq.s32.totalorder %s15, 1
      %p126 = por %p124, %p125
      %p127 = scmp.ne.s32.totalorder %s119, %s122
      %p128 = scmp.eq.s32.totalorder %s15, 0
      %p129 = por %p127, %p128
      %p130 = scmp.ne.s32.totalorder %s119, %s122
      %p131 = scmp.eq.s32.totalorder %s20, 1
      %p132 = por %p130, %p131
      %p133 = scmp.ne.s32.totalorder %s122, %s123
      %p134 = scmp.eq.s32.totalorder %s20, 0
      %p135 = por %p133, %p134
      %p136 = scmp.ne.s32.totalorder %s122, %s123
      %p137 = scmp.eq.s32.totalorder %s21, 1
      %p138 = por %p136, %p137
      %p140 = scmp.ne.s32.totalorder %s123, %s139
      %p141 = scmp.eq.s32.totalorder %s21, 0
      %p142 = por %p140, %p141
      %s143 = ssub.s32 %s23, %s37
      %p144 = scmp.eq.s32.totalorder %s143, 0
      %s146 = sadd.s32 %s145, 1
      %s147 = scalar_select %p144, %s145, %s146
      %p150 = pneg %p144
      %p151 = scmp.eq.s32.totalorder %s15, 1
      %p152 = por %p150, %p151
      %p153 = scmp.ne.s32.totalorder %s145, %s148
      %p154 = scmp.eq.s32.totalorder %s15, 0
      %p155 = por %p153, %p154
      %p156 = scmp.ne.s32.totalorder %s145, %s148
      %p157 = scmp.eq.s32.totalorder %s20, 1
      %p158 = por %p156, %p157
      %p159 = scmp.ne.s32.totalorder %s148, %s149
      %p160 = scmp.eq.s32.totalorder %s20, 0
      %p161 = por %p159, %p160
      %p162 = scmp.ne.s32.totalorder %s148, %s149
      %p163 = scmp.eq.s32.totalorder %s21, 1
      %p164 = por %p162, %p163
      %p166 = scmp.ne.s32.totalorder %s149, %s165
      %p167 = scmp.eq.s32.totalorder %s21, 0
      %p168 = por %p166, %p167
      %p169 = scmp.le.s32.totalorder 1, %s15
      %p170 = scmp.lt.s32.totalorder %s15, 3
      %p171 = pnand %p169, %p170
      %p172 = pneg %p171
      // Predicated region
      $region9: #{tpu_custom_call.1} parent=5 // pred_check
        _
      $region10: #{tpu_custom_call.1} parent=5 // pred_check_branch
        %174 = sbr.rel (%p171) target = $region12
      $region11: #{tpu_custom_call.1} parent=5 // pred_region
        %s175 = ssub.s32 %s15, 1
        // Predicated region
        $region13: #{tpu_custom_call.1} parent=11 // pred_check
          %p176 = pneg %p60
        $region14: #{tpu_custom_call.1} parent=11 // pred_check_branch
          %178 = sbr.rel (%p176) target = $region16
        $region15: #{tpu_custom_call.1} parent=11 // pred_region
          %s179 = smul.u32 2, %s25
          %s181 = ssub.s32 2048, 2048
          %182 = vsyncadd [#allocation7], %s181
          %s183 = smul.addr %s179, 8
          %s184 = smul.addr %s183, 128
          %s185 = scalar_lea.hbm %s0, %s184
          %s186 = sshll.u32 [#allocation6], 4
          %s187 = int_to_ptr.vmem [resolvable:$true] %s186
          %192 = dma.hbm_to_vmem [thread:$0]  %s185, 2048, %s187, [#allocation7], 1024, 1024, 64
        $region16: #{tpu_custom_call.1} parent=11 // pred_fallthru
          _
        // Predicated region
        $region17: #{tpu_custom_call.1} parent=11 // pred_check
          %p193 = pneg %p81
        $region18: #{tpu_custom_call.1} parent=11 // pred_check_branch
          %195 = sbr.rel (%p193) target = $region20
        $region19: #{tpu_custom_call.1} parent=11 // pred_region
          %s197 = ssub.s32 1024, 1024
          %198 = vsyncadd [#allocation10], %s197
          %s200 = sshll.u32 [#allocation9], 4
          %s201 = int_to_ptr.vmem [resolvable:$true] %s200
          %203 = dma.hbm_to_vmem [thread:$0]  %s1, 1024, %s201, [#allocation10]
        $region20: #{tpu_custom_call.1} parent=11 // pred_fallthru
          _
      $region12: #{tpu_custom_call.1} parent=5 // pred_fallthru
        _
      %p204 = scmp.lt.s32.totalorder %s15, 2
      // Predicated region
      $region21: #{tpu_custom_call.1} parent=5 // pred_check
        %p205 = pneg %p204
      $region22: #{tpu_custom_call.1} parent=5 // pred_check_branch
        %207 = sbr.rel (%p205) target = $region24
      $region23: #{tpu_custom_call.1} parent=5 // pred_region
        // Predicated region
        $region25: #{tpu_custom_call.1} parent=23 // pred_check
          %p208 = pneg %p103
        $region26: #{tpu_custom_call.1} parent=23 // pred_check_branch
          %210 = sbr.rel (%p208) target = $region28
        $region27: #{tpu_custom_call.1} parent=23 // pred_region
          %s211 = sand.u32 %s15, 1
          %s212 = scalar_lea.sflag [#allocation7], %s211
          %s213 = sand.u32 %s93, 1
          %s214 = smul.addr %s213, 1024
          %s215 = scalar_lea.vmem [#allocation11], %s214
          %s216 = smul.u32 32, %s23
          %s217 = smul.u32 4, %s24
          %s219 = ssub.s32 16384, 16384
          %220 = vsyncadd %s212, %s219
          %s221 = smul.addr %s216, 8
          %s222 = sadd.s32 %s217, %s221
          %s223 = smul.addr %s222, 128
          %s224 = scalar_lea.hbm %s2, %s223
          %s225 = sshll.u32 %s215, 4
          %s226 = int_to_ptr.vmem [resolvable:$true] %s225
          %231 = dma.hbm_to_vmem [thread:$0]  %s224, 16384, %s226, %s212, 1024, 512, 32
        $region28: #{tpu_custom_call.1} parent=23 // pred_fallthru
          _
      $region24: #{tpu_custom_call.1} parent=5 // pred_fallthru
        _
      %p232 = scmp.le.s32.totalorder 1, %s15
      %p233 = scmp.lt.s32.totalorder %s15, 3
      %p234 = pnand %p232, %p233
      %p235 = pneg %p234
      // Predicated region
      $region29: #{tpu_custom_call.1} parent=5 // pred_check
        _
      $region30: #{tpu_custom_call.1} parent=5 // pred_check_branch
        %237 = sbr.rel (%p234) target = $region32
      $region31: #{tpu_custom_call.1} parent=5 // pred_region
        %s238 = ssub.s32 %s15, 1
        // Predicated region
        $region33: #{tpu_custom_call.1} parent=31 // pred_check
          %p239 = pneg %p60
        $region34: #{tpu_custom_call.1} parent=31 // pred_check_branch
          %241 = sbr.rel (%p239) target = $region36
        $region35: #{tpu_custom_call.1} parent=31 // pred_region
          %242 = dma.done [#allocation7], 2048
        $region36: #{tpu_custom_call.1} parent=31 // pred_fallthru
          _
        // Predicated region
        $region37: #{tpu_custom_call.1} parent=31 // pred_check
          %p243 = pneg %p81
        $region38: #{tpu_custom_call.1} parent=31 // pred_check_branch
          %245 = sbr.rel (%p243) target = $region40
        $region39: #{tpu_custom_call.1} parent=31 // pred_region
          %246 = dma.done [#allocation10], 1024
        $region40: #{tpu_custom_call.1} parent=31 // pred_fallthru
          _
        %s247 = sand.u32 %s20, 1
        %s248 = scalar_lea.sflag [#allocation7], %s247
        %s249 = sand.u32 %s96, 1
        %s250 = smul.addr %s249, 1024
        %s251 = scalar_lea.vmem [#allocation11], %s250
        // Predicated region
        $region41: #{tpu_custom_call.1} parent=31 // pred_check
          %p252 = pneg %p109
        $region42: #{tpu_custom_call.1} parent=31 // pred_check_branch
          %254 = sbr.rel (%p252) target = $region44
        $region43: #{tpu_custom_call.1} parent=31 // pred_region
          %255 = dma.done %s248, 16384
        $region44: #{tpu_custom_call.1} parent=31 // pred_fallthru
          _
        %p256 = pneg %p60
        %p257 = pneg %p57
        %p258 = pneg %p81
        %p259 = pneg %p78
        %s260 = sand.u32 %s20, 1
        %s261 = scalar_lea.sflag [#allocation7], %s260
        %s262 = sand.u32 %s96, 1
        %s263 = smul.addr %s262, 1024
        %s264 = scalar_lea.vmem [#allocation11], %s263
        %p265 = pneg %p109
        %p266 = pneg %p106
        %p267 = pneg %p135
        %p268 = pneg %p132
        %p269 = pneg %p161
        %p270 = pneg %p158
        %s271 = smul.u32 2, %s25
        %s272 = smul.u32 32, %s26
        %s273 = smul.u32 4, %s27
        %s274 = smul.u32 2, %s25
        %s275 = smul.u32 2, %s26
        %p276 = scmp.eq.s32.totalorder %s26, 0
        %p277 = scmp.eq.s32.totalorder %s27, 0
        %p278 = pnand %p276, %p277
        %p279 = pneg %p278
        // Predicated region
        $region45: #{tpu_custom_call.1} parent=31 // pred_check
          _
        $region46: #{tpu_custom_call.1} parent=31 // pred_check_branch
          %281 = sbr.rel (%p278) target = $region48
        $region47: #{tpu_custom_call.1} parent=31 // pred_region
          %vm282 = vcmask 7168
          %283 = vst.msk [vmem:[#allocation4] sm:$0xff] %vm282, -1e+30
          %284 = vst.msk [vmem:[#allocation4 + $0x8] sm:$0xff] %vm282, -1e+30
          %285 = vst.msk [vmem:[#allocation5] sm:$0xff] %vm282, 0.0
          %286 = vst.msk [vmem:[#allocation5 + $0x8] sm:$0xff] %vm282, 0.0
        $region48: #{tpu_custom_call.1} parent=31 // pred_fallthru
          _
        // Predicated region
        $region49: #{tpu_custom_call.1} parent=31 // pred_check
          %p287 = pneg %p277
        $region50: #{tpu_custom_call.1} parent=31 // pred_check_branch
          %289 = sbr.rel (%p287) target = $region52
        $region51: #{tpu_custom_call.1} parent=31 // pred_region
          %290 = vst [vmem:[#allocation2] sm:$0xff] 0.0
          %291 = vst [vmem:[#allocation2 + $0x8] sm:$0xff] 0.0
          %292 = vst [vmem:[#allocation2 + $0x10] sm:$0xff] 0.0
          %293 = vst [vmem:[#allocation2 + $0x18] sm:$0xff] 0.0
          %294 = vst [vmem:[#allocation3] sm:$0xff] 0.0
          %295 = vst [vmem:[#allocation3 + $0x8] sm:$0xff] 0.0
        $region52: #{tpu_custom_call.1} parent=31 // pred_fallthru
          _
        %s296 = smul.u32 %s27, 512
        %v297 = vld [vmem:[%s251] sm:$0xff]
        %v298 = vld [vmem:[%s251 + $0x8] sm:$0xff]
        %v299 = vld [vmem:[%s251 + $0x10] sm:$0xff]
        %v300 = vld [vmem:[%s251 + $0x18] sm:$0xff]
        %v301 = vld [vmem:[%s251 + $0x20] sm:$0xff]
        %v302 = vld [vmem:[%s251 + $0x28] sm:$0xff]
        %v303 = vld [vmem:[%s251 + $0x30] sm:$0xff]
        %v304 = vld [vmem:[%s251 + $0x38] sm:$0xff]
        %v305 = vld [vmem:[%s251 + $0x40] sm:$0xff]
        %v306 = vld [vmem:[%s251 + $0x48] sm:$0xff]
        %v307 = vld [vmem:[%s251 + $0x50] sm:$0xff]
        %v308 = vld [vmem:[%s251 + $0x58] sm:$0xff]
        %v309 = vld [vmem:[%s251 + $0x60] sm:$0xff]
        %v310 = vld [vmem:[%s251 + $0x68] sm:$0xff]
        %v311 = vld [vmem:[%s251 + $0x70] sm:$0xff]
        %v312 = vld [vmem:[%s251 + $0x78] sm:$0xff]
        %v313 = vld [vmem:[%s251 + $0x80] sm:$0xff]
        %v314 = vld [vmem:[%s251 + $0x88] sm:$0xff]
        %v315 = vld [vmem:[%s251 + $0x90] sm:$0xff]
        %v316 = vld [vmem:[%s251 + $0x98] sm:$0xff]
        %v317 = vld [vmem:[%s251 + $0xa0] sm:$0xff]
        %v318 = vld [vmem:[%s251 + $0xa8] sm:$0xff]
        %v319 = vld [vmem:[%s251 + $0xb0] sm:$0xff]
        %v320 = vld [vmem:[%s251 + $0xb8] sm:$0xff]
        %v321 = vld [vmem:[%s251 + $0xc0] sm:$0xff]
        %v322 = vld [vmem:[%s251 + $0xc8] sm:$0xff]
        %v323 = vld [vmem:[%s251 + $0xd0] sm:$0xff]
        %v324 = vld [vmem:[%s251 + $0xd8] sm:$0xff]
        %v325 = vld [vmem:[%s251 + $0xe0] sm:$0xff]
        %v326 = vld [vmem:[%s251 + $0xe8] sm:$0xff]
        %v327 = vld [vmem:[%s251 + $0xf0] sm:$0xff]
        %v328 = vld [vmem:[%s251 + $0xf8] sm:$0xff]
        %v329 = vld [vmem:[%s251 + $0x100] sm:$0xff]
        %v330 = vld [vmem:[%s251 + $0x108] sm:$0xff]
        %v331 = vld [vmem:[%s251 + $0x110] sm:$0xff]
        %v332 = vld [vmem:[%s251 + $0x118] sm:$0xff]
        %v333 = vld [vmem:[%s251 + $0x120] sm:$0xff]
        %v334 = vld [vmem:[%s251 + $0x128] sm:$0xff]
        %v335 = vld [vmem:[%s251 + $0x130] sm:$0xff]
        %v336 = vld [vmem:[%s251 + $0x138] sm:$0xff]
        %v337 = vld [vmem:[%s251 + $0x140] sm:$0xff]
        %v338 = vld [vmem:[%s251 + $0x148] sm:$0xff]
        %v339 = vld [vmem:[%s251 + $0x150] sm:$0xff]
        %v340 = vld [vmem:[%s251 + $0x158] sm:$0xff]
        %v341 = vld [vmem:[%s251 + $0x160] sm:$0xff]
        %v342 = vld [vmem:[%s251 + $0x168] sm:$0xff]
        %v343 = vld [vmem:[%s251 + $0x170] sm:$0xff]
        %v344 = vld [vmem:[%s251 + $0x178] sm:$0xff]
        %v345 = vld [vmem:[%s251 + $0x180] sm:$0xff]
        %v346 = vld [vmem:[%s251 + $0x188] sm:$0xff]
        %v347 = vld [vmem:[%s251 + $0x190] sm:$0xff]
        %v348 = vld [vmem:[%s251 + $0x198] sm:$0xff]
        %v349 = vld [vmem:[%s251 + $0x1a0] sm:$0xff]
        %v350 = vld [vmem:[%s251 + $0x1a8] sm:$0xff]
        %v351 = vld [vmem:[%s251 + $0x1b0] sm:$0xff]
        %v352 = vld [vmem:[%s251 + $0x1b8] sm:$0xff]
        %v353 = vld [vmem:[%s251 + $0x1c0] sm:$0xff]
        %v354 = vld [vmem:[%s251 + $0x1c8] sm:$0xff]
        %v355 = vld [vmem:[%s251 + $0x1d0] sm:$0xff]
        %v356 = vld [vmem:[%s251 + $0x1d8] sm:$0xff]
        %v357 = vld [vmem:[%s251 + $0x1e0] sm:$0xff]
        %v358 = vld [vmem:[%s251 + $0x1e8] sm:$0xff]
        %v359 = vld [vmem:[%s251 + $0x1f0] sm:$0xff]
        %v360 = vld [vmem:[%s251 + $0x1f8] sm:$0xff]
        %v361 = vld [vmem:[%s251 + $0x200] sm:$0xff]
        %v362 = vld [vmem:[%s251 + $0x208] sm:$0xff]
        %v363 = vld [vmem:[%s251 + $0x210] sm:$0xff]
        %v364 = vld [vmem:[%s251 + $0x218] sm:$0xff]
        %v365 = vld [vmem:[%s251 + $0x220] sm:$0xff]
        %v366 = vld [vmem:[%s251 + $0x228] sm:$0xff]
        %v367 = vld [vmem:[%s251 + $0x230] sm:$0xff]
        %v368 = vld [vmem:[%s251 + $0x238] sm:$0xff]
        %v369 = vld [vmem:[%s251 + $0x240] sm:$0xff]
        %v370 = vld [vmem:[%s251 + $0x248] sm:$0xff]
        %v371 = vld [vmem:[%s251 + $0x250] sm:$0xff]
        %v372 = vld [vmem:[%s251 + $0x258] sm:$0xff]
        %v373 = vld [vmem:[%s251 + $0x260] sm:$0xff]
        %v374 = vld [vmem:[%s251 + $0x268] sm:$0xff]
        %v375 = vld [vmem:[%s251 + $0x270] sm:$0xff]
        %v376 = vld [vmem:[%s251 + $0x278] sm:$0xff]
        %v377 = vld [vmem:[%s251 + $0x280] sm:$0xff]
        %v378 = vld [vmem:[%s251 + $0x288] sm:$0xff]
        %v379 = vld [vmem:[%s251 + $0x290] sm:$0xff]
        %v380 = vld [vmem:[%s251 + $0x298] sm:$0xff]
        %v381 = vld [vmem:[%s251 + $0x2a0] sm:$0xff]
        %v382 = vld [vmem:[%s251 + $0x2a8] sm:$0xff]
        %v383 = vld [vmem:[%s251 + $0x2b0] sm:$0xff]
        %v384 = vld [vmem:[%s251 + $0x2b8] sm:$0xff]
        %v385 = vld [vmem:[%s251 + $0x2c0] sm:$0xff]
        %v386 = vld [vmem:[%s251 + $0x2c8] sm:$0xff]
        %v387 = vld [vmem:[%s251 + $0x2d0] sm:$0xff]
        %v388 = vld [vmem:[%s251 + $0x2d8] sm:$0xff]
        %v389 = vld [vmem:[%s251 + $0x2e0] sm:$0xff]
        %v390 = vld [vmem:[%s251 + $0x2e8] sm:$0xff]
        %v391 = vld [vmem:[%s251 + $0x2f0] sm:$0xff]
        %v392 = vld [vmem:[%s251 + $0x2f8] sm:$0xff]
        %v393 = vld [vmem:[%s251 + $0x300] sm:$0xff]
        %v394 = vld [vmem:[%s251 + $0x308] sm:$0xff]
        %v395 = vld [vmem:[%s251 + $0x310] sm:$0xff]
        %v396 = vld [vmem:[%s251 + $0x318] sm:$0xff]
        %v397 = vld [vmem:[%s251 + $0x320] sm:$0xff]
        %v398 = vld [vmem:[%s251 + $0x328] sm:$0xff]
        %v399 = vld [vmem:[%s251 + $0x330] sm:$0xff]
        %v400 = vld [vmem:[%s251 + $0x338] sm:$0xff]
        %v401 = vld [vmem:[%s251 + $0x340] sm:$0xff]
        %v402 = vld [vmem:[%s251 + $0x348] sm:$0xff]
        %v403 = vld [vmem:[%s251 + $0x350] sm:$0xff]
        %v404 = vld [vmem:[%s251 + $0x358] sm:$0xff]
        %v405 = vld [vmem:[%s251 + $0x360] sm:$0xff]
        %v406 = vld [vmem:[%s251 + $0x368] sm:$0xff]
        %v407 = vld [vmem:[%s251 + $0x370] sm:$0xff]
        %v408 = vld [vmem:[%s251 + $0x378] sm:$0xff]
        %v409 = vld [vmem:[%s251 + $0x380] sm:$0xff]
        %v410 = vld [vmem:[%s251 + $0x388] sm:$0xff]
        %v411 = vld [vmem:[%s251 + $0x390] sm:$0xff]
        %v412 = vld [vmem:[%s251 + $0x398] sm:$0xff]
        %v413 = vld [vmem:[%s251 + $0x3a0] sm:$0xff]
        %v414 = vld [vmem:[%s251 + $0x3a8] sm:$0xff]
        %v415 = vld [vmem:[%s251 + $0x3b0] sm:$0xff]
        %v416 = vld [vmem:[%s251 + $0x3b8] sm:$0xff]
        %v417 = vld [vmem:[%s251 + $0x3c0] sm:$0xff]
        %v418 = vld [vmem:[%s251 + $0x3c8] sm:$0xff]
        %v419 = vld [vmem:[%s251 + $0x3d0] sm:$0xff]
        %v420 = vld [vmem:[%s251 + $0x3d8] sm:$0xff]
        %v421 = vld [vmem:[%s251 + $0x3e0] sm:$0xff]
        %v422 = vld [vmem:[%s251 + $0x3e8] sm:$0xff]
        %v423 = vld [vmem:[%s251 + $0x3f0] sm:$0xff]
        %v424 = vld [vmem:[%s251 + $0x3f8] sm:$0xff]
        %v425 = vld [vmem:[#allocation2] sm:$0xff]
        %v426 = vld [vmem:[#allocation2 + $0x8] sm:$0xff]
        %v427 = vld [vmem:[#allocation2 + $0x10] sm:$0xff]
        %v428 = vld [vmem:[#allocation2 + $0x18] sm:$0xff]
        %s429 = sshra.s32 %s296, 7
        %s430 = sand.u32 %s296, 127
        %s431 = smul.addr %s429, 8
        %s432 = scalar_lea.vmem [#allocation6], %s431
        %v433 = vld [vmem:[%s432] sm:$0xff]
        %v434 = vld [vmem:[%s432 + $0x8] sm:$0xff]
        %v435 = vld [vmem:[%s432 + $0x10] sm:$0xff]
        %v436 = vld [vmem:[%s432 + $0x18] sm:$0xff]
        %v437 = vld [vmem:[%s432 + $0x40] sm:$0xff]
        %v438 = vld [vmem:[%s432 + $0x48] sm:$0xff]
        %v439 = vld [vmem:[%s432 + $0x50] sm:$0xff]
        %v440 = vld [vmem:[%s432 + $0x58] sm:$0xff]
        %441 = vmatprep.subr.mxu0 %v298
        %442 = vmatpush1.xpose.msra.mxu0 %v297
        %443 = vmatprep.subr.mxu0 %v302
        %444 = vmatpush1.xpose.msra.mxu0 %v301
        %445 = vmatprep.subr.mxu0 %v306
        %446 = vmatpush1.xpose.msra.mxu0 %v305
        %447 = vmatprep.subr.mxu0 %v310
        %448 = vmatpush1.xpose.msra.mxu0 %v309
        %449 = vmatprep.subr.mxu0 %v314
        %450 = vmatpush1.xpose.msra.mxu0 %v313
        %451 = vmatprep.subr.mxu0 %v318
        %452 = vmatpush1.xpose.msra.mxu0 %v317
        %453 = vmatprep.subr.mxu0 %v322
        %454 = vmatpush1.xpose.msra.mxu0 %v321
        %455 = vmatprep.subr.mxu0 %v326
        %456 = vmatpush1.xpose.msra.mxu0 %v325
        %457 = vmatprep.subr.mxu0 %v330
        %458 = vmatpush1.xpose.msra.mxu0 %v329
        %459 = vmatprep.subr.mxu0 %v334
        %460 = vmatpush1.xpose.msra.mxu0 %v333
        %461 = vmatprep.subr.mxu0 %v338
        %462 = vmatpush1.xpose.msra.mxu0 %v337
        %463 = vmatprep.subr.mxu0 %v342
        %464 = vmatpush1.xpose.msra.mxu0 %v341
        %465 = vmatprep.subr.mxu0 %v346
        %466 = vmatpush1.xpose.msra.mxu0 %v345
        %467 = vmatprep.subr.mxu0 %v350
        %468 = vmatpush1.xpose.msra.mxu0 %v349
        %469 = vmatprep.subr.mxu0 %v354
        %470 = vmatpush1.xpose.msra.mxu0 %v353
        %471 = vmatprep.subr.mxu0 %v358
        %472 = vmatpush1.xpose.msra.mxu0 %v357
        %473 = vmatprep.subr.mxu0 %v362
        %474 = vmatpush1.xpose.msra.mxu0 %v361
        %475 = vmatprep.subr.mxu0 %v366
        %476 = vmatpush1.xpose.msra.mxu0 %v365
        %477 = vmatprep.subr.mxu0 %v370
        %478 = vmatpush1.xpose.msra.mxu0 %v369
        %479 = vmatprep.subr.mxu0 %v374
        %480 = vmatpush1.xpose.msra.mxu0 %v373
        %481 = vmatprep.subr.mxu0 %v378
        %482 = vmatpush1.xpose.msra.mxu0 %v377
        %483 = vmatprep.subr.mxu0 %v382
        %484 = vmatpush1.xpose.msra.mxu0 %v381
        %485 = vmatprep.subr.mxu0 %v386
        %486 = vmatpush1.xpose.msra.mxu0 %v385
        %487 = vmatprep.subr.mxu0 %v390
        %488 = vmatpush1.xpose.msra.mxu0 %v389
        %489 = vmatprep.subr.mxu0 %v394
        %490 = vmatpush1.xpose.msra.mxu0 %v393
        %491 = vmatprep.subr.mxu0 %v398
        %492 = vmatpush1.xpose.msra.mxu0 %v397
        %493 = vmatprep.subr.mxu0 %v402
        %494 = vmatpush1.xpose.msra.mxu0 %v401
        %495 = vmatprep.subr.mxu0 %v406
        %496 = vmatpush1.xpose.msra.mxu0 %v405
        %497 = vmatprep.subr.mxu0 %v410
        %498 = vmatpush1.xpose.msra.mxu0 %v409
        %499 = vmatprep.subr.mxu0 %v414
        %500 = vmatpush1.xpose.msra.mxu0 %v413
        %501 = vmatprep.subr.mxu0 %v418
        %502 = vmatpush1.xpose.msra.mxu0 %v417
        %503 = vmatprep.subr.mxu0 %v422
        %504 = vmatpush1.xpose.msra.mxu0 %v421
        %505 = vmatprep.mubr.f32.mxu0 %v434
        %506 = vmatmul.mubr.f32.gmra.mrb[0].mxu0 %v433
        %v507 = vpop.f32.mrb[0].mxu0
        %v508 = vadd.f32 0.0, %v507
        %v509 = vpop.f32.mrb[0].mxu0
        %v510 = vadd.f32 0.0, %v509
        %511 = vmatprep.mubr.f32.mxu0 %v438
        %512 = vmatmul.mubr.f32.gmra.mrb[0].mxu0 %v437
        %v513 = vpop.f32.mrb[0].mxu0
        %v514 = vadd.f32 0.0, %v513
        %v515 = vpop.f32.mrb[0].mxu0
        %v516 = vadd.f32 0.0, %v515
        %517 = vdwg.mxu0
        %518 = vmatprep.subr.mxu0 %v300
        %519 = vmatpush1.xpose.msra.mxu0 %v299
        %520 = vmatprep.subr.mxu0 %v304
        %521 = vmatpush1.xpose.msra.mxu0 %v303
        %522 = vmatprep.subr.mxu0 %v308
        %523 = vmatpush1.xpose.msra.mxu0 %v307
        %524 = vmatprep.subr.mxu0 %v312
        %525 = vmatpush1.xpose.msra.mxu0 %v311
        %526 = vmatprep.subr.mxu0 %v316
        %527 = vmatpush1.xpose.msra.mxu0 %v315
        %528 = vmatprep.subr.mxu0 %v320
        %529 = vmatpush1.xpose.msra.mxu0 %v319
        %530 = vmatprep.subr.mxu0 %v324
        %531 = vmatpush1.xpose.msra.mxu0 %v323
        %532 = vmatprep.subr.mxu0 %v328
        %533 = vmatpush1.xpose.msra.mxu0 %v327
        %534 = vmatprep.subr.mxu0 %v332
        %535 = vmatpush1.xpose.msra.mxu0 %v331
        %536 = vmatprep.subr.mxu0 %v336
        %537 = vmatpush1.xpose.msra.mxu0 %v335
        %538 = vmatprep.subr.mxu0 %v340
        %539 = vmatpush1.xpose.msra.mxu0 %v339
        %540 = vmatprep.subr.mxu0 %v344
        %541 = vmatpush1.xpose.msra.mxu0 %v343
        %542 = vmatprep.subr.mxu0 %v348
        %543 = vmatpush1.xpose.msra.mxu0 %v347
        %544 = vmatprep.subr.mxu0 %v352
        %545 = vmatpush1.xpose.msra.mxu0 %v351
        %546 = vmatprep.subr.mxu0 %v356
        %547 = vmatpush1.xpose.msra.mxu0 %v355
        %548 = vmatprep.subr.mxu0 %v360
        %549 = vmatpush1.xpose.msra.mxu0 %v359
        %550 = vmatprep.subr.mxu0 %v364
        %551 = vmatpush1.xpose.msra.mxu0 %v363
        %552 = vmatprep.subr.mxu0 %v368
        %553 = vmatpush1.xpose.msra.mxu0 %v367
        %554 = vmatprep.subr.mxu0 %v372
        %555 = vmatpush1.xpose.msra.mxu0 %v371
        %556 = vmatprep.subr.mxu0 %v376
        %557 = vmatpush1.xpose.msra.mxu0 %v375
        %558 = vmatprep.subr.mxu0 %v380
        %559 = vmatpush1.xpose.msra.mxu0 %v379
        %560 = vmatprep.subr.mxu0 %v384
        %561 = vmatpush1.xpose.msra.mxu0 %v383
        %562 = vmatprep.subr.mxu0 %v388
        %563 = vmatpush1.xpose.msra.mxu0 %v387
        %564 = vmatprep.subr.mxu0 %v392
        %565 = vmatpush1.xpose.msra.mxu0 %v391
        %566 = vmatprep.subr.mxu0 %v396
        %567 = vmatpush1.xpose.msra.mxu0 %v395
        %568 = vmatprep.subr.mxu0 %v400
        %569 = vmatpush1.xpose.msra.mxu0 %v399
        %570 = vmatprep.subr.mxu0 %v404
        %571 = vmatpush1.xpose.msra.mxu0 %v403
        %572 = vmatprep.subr.mxu0 %v408
        %573 = vmatpush1.xpose.msra.mxu0 %v407
        %574 = vmatprep.subr.mxu0 %v412
        %575 = vmatpush1.xpose.msra.mxu0 %v411
        %576 = vmatprep.subr.mxu0 %v416
        %577 = vmatpush1.xpose.msra.mxu0 %v415
        %578 = vmatprep.subr.mxu0 %v420
        %579 = vmatpush1.xpose.msra.mxu0 %v419
        %580 = vmatprep.subr.mxu0 %v424
        %581 = vmatpush1.xpose.msra.mxu0 %v423
        %582 = vmatprep.mubr.f32.mxu0 %v436
        %583 = vmatmul.mubr.f32.gmra.mrb[0].mxu0 %v435
        %v584 = vpop.f32.mrb[0].mxu0
        %v585 = vadd.f32 %v508, %v584
        %v586 = vpop.f32.mrb[0].mxu0
        %v587 = vadd.f32 %v510, %v586
        %588 = vmatprep.mubr.f32.mxu0 %v440
        %589 = vmatmul.mubr.f32.gmra.mrb[0].mxu0 %v439
        %v590 = vpop.f32.mrb[0].mxu0
        %v591 = vadd.f32 %v514, %v590
        %v592 = vpop.f32.mrb[0].mxu0
        %v593 = vadd.f32 %v516, %v592
        %594 = vdwg.mxu0
        %v595 = vadd.f32 %v425, %v585
        %v596 = vadd.f32 %v426, %v587
        %v597 = vadd.f32 %v427, %v591
        %v598 = vadd.f32 %v428, %v593
        %599 = vst [vmem:[#allocation2] sm:$0xff] %v595
        %600 = vst [vmem:[#allocation2 + $0x8] sm:$0xff] %v596
        %601 = vst [vmem:[#allocation2 + $0x10] sm:$0xff] %v597
        %602 = vst [vmem:[#allocation2 + $0x18] sm:$0xff] %v598
        %v603 = vld [vmem:[#allocation3] sm:$0xff]
        %v604 = vld [vmem:[#allocation3 + $0x8] sm:$0xff]
        %s605 = smul.addr %s429, 8
        %s606 = scalar_lea.vmem [#allocation9], %s605
        %v607 = vld [vmem:[%s606] sm:$0xff]
        %v608 = vld [vmem:[%s606 + $0x8] sm:$0xff]
        %v609 = vld [vmem:[%s606 + $0x10] sm:$0xff]
        %v610 = vld [vmem:[%s606 + $0x18] sm:$0xff]
        %611 = vmatprep.subr.mxu0 %v298
        %612 = vmatpush1.xpose.msra.mxu0 %v297
        %613 = vmatprep.subr.mxu0 %v302
        %614 = vmatpush1.xpose.msra.mxu0 %v301
        %615 = vmatprep.subr.mxu0 %v306
        %616 = vmatpush1.xpose.msra.mxu0 %v305
        %617 = vmatprep.subr.mxu0 %v310
        %618 = vmatpush1.xpose.msra.mxu0 %v309
        %619 = vmatprep.subr.mxu0 %v314
        %620 = vmatpush1.xpose.msra.mxu0 %v313
        %621 = vmatprep.subr.mxu0 %v318
        %622 = vmatpush1.xpose.msra.mxu0 %v317
        %623 = vmatprep.subr.mxu0 %v322
        %624 = vmatpush1.xpose.msra.mxu0 %v321
        %625 = vmatprep.subr.mxu0 %v326
        %626 = vmatpush1.xpose.msra.mxu0 %v325
        %627 = vmatprep.subr.mxu0 %v330
        %628 = vmatpush1.xpose.msra.mxu0 %v329
        %629 = vmatprep.subr.mxu0 %v334
        %630 = vmatpush1.xpose.msra.mxu0 %v333
        %631 = vmatprep.subr.mxu0 %v338
        %632 = vmatpush1.xpose.msra.mxu0 %v337
        %633 = vmatprep.subr.mxu0 %v342
        %634 = vmatpush1.xpose.msra.mxu0 %v341
        %635 = vmatprep.subr.mxu0 %v346
        %636 = vmatpush1.xpose.msra.mxu0 %v345
        %637 = vmatprep.subr.mxu0 %v350
        %638 = vmatpush1.xpose.msra.mxu0 %v349
        %639 = vmatprep.subr.mxu0 %v354
        %640 = vmatpush1.xpose.msra.mxu0 %v353
        %641 = vmatprep.subr.mxu0 %v358
        %642 = vmatpush1.xpose.msra.mxu0 %v357
        %643 = vmatprep.subr.mxu0 %v362
        %644 = vmatpush1.xpose.msra.mxu0 %v361
        %645 = vmatprep.subr.mxu0 %v366
        %646 = vmatpush1.xpose.msra.mxu0 %v365
        %647 = vmatprep.subr.mxu0 %v370
        %648 = vmatpush1.xpose.msra.mxu0 %v369
        %649 = vmatprep.subr.mxu0 %v374
        %650 = vmatpush1.xpose.msra.mxu0 %v373
        %651 = vmatprep.subr.mxu0 %v378
        %652 = vmatpush1.xpose.msra.mxu0 %v377
        %653 = vmatprep.subr.mxu0 %v382
        %654 = vmatpush1.xpose.msra.mxu0 %v381
        %655 = vmatprep.subr.mxu0 %v386
        %656 = vmatpush1.xpose.msra.mxu0 %v385
        %657 = vmatprep.subr.mxu0 %v390
        %658 = vmatpush1.xpose.msra.mxu0 %v389
        %659 = vmatprep.subr.mxu0 %v394
        %660 = vmatpush1.xpose.msra.mxu0 %v393
        %661 = vmatprep.subr.mxu0 %v398
        %662 = vmatpush1.xpose.msra.mxu0 %v397
        %663 = vmatprep.subr.mxu0 %v402
        %664 = vmatpush1.xpose.msra.mxu0 %v401
        %665 = vmatprep.subr.mxu0 %v406
        %666 = vmatpush1.xpose.msra.mxu0 %v405
        %667 = vmatprep.subr.mxu0 %v410
        %668 = vmatpush1.xpose.msra.mxu0 %v409
        %669 = vmatprep.subr.mxu0 %v414
        %670 = vmatpush1.xpose.msra.mxu0 %v413
        %671 = vmatprep.subr.mxu0 %v418
        %672 = vmatpush1.xpose.msra.mxu0 %v417
        %673 = vmatprep.subr.mxu0 %v422
        %674 = vmatpush1.xpose.msra.mxu0 %v421
        %675 = vmatprep.mubr.f32.mxu0 %v608
        %676 = vmatmul.mubr.f32.gmra.mrb[0].mxu0 %v607
        %v677 = vpop.f32.mrb[0].mxu0
        %v678 = vadd.f32 0.0, %v677
        %v679 = vpop.f32.mrb[0].mxu0
        %v680 = vadd.f32 0.0, %v679
        %681 = vdwg.mxu0
        %682 = vmatprep.subr.mxu0 %v300
        %683 = vmatpush1.xpose.msra.mxu0 %v299
        %684 = vmatprep.subr.mxu0 %v304
        %685 = vmatpush1.xpose.msra.mxu0 %v303
        %686 = vmatprep.subr.mxu0 %v308
        %687 = vmatpush1.xpose.msra.mxu0 %v307
        %688 = vmatprep.subr.mxu0 %v312
        %689 = vmatpush1.xpose.msra.mxu0 %v311
        %690 = vmatprep.subr.mxu0 %v316
        %691 = vmatpush1.xpose.msra.mxu0 %v315
        %692 = vmatprep.subr.mxu0 %v320
        %693 = vmatpush1.xpose.msra.mxu0 %v319
        %694 = vmatprep.subr.mxu0 %v324
        %695 = vmatpush1.xpose.msra.mxu0 %v323
        %696 = vmatprep.subr.mxu0 %v328
        %697 = vmatpush1.xpose.msra.mxu0 %v327
        %698 = vmatprep.subr.mxu0 %v332
        %699 = vmatpush1.xpose.msra.mxu0 %v331
        %700 = vmatprep.subr.mxu0 %v336
        %701 = vmatpush1.xpose.msra.mxu0 %v335
        %702 = vmatprep.subr.mxu0 %v340
        %703 = vmatpush1.xpose.msra.mxu0 %v339
        %704 = vmatprep.subr.mxu0 %v344
        %705 = vmatpush1.xpose.msra.mxu0 %v343
        %706 = vmatprep.subr.mxu0 %v348
        %707 = vmatpush1.xpose.msra.mxu0 %v347
        %708 = vmatprep.subr.mxu0 %v352
        %709 = vmatpush1.xpose.msra.mxu0 %v351
        %710 = vmatprep.subr.mxu0 %v356
        %711 = vmatpush1.xpose.msra.mxu0 %v355
        %712 = vmatprep.subr.mxu0 %v360
        %713 = vmatpush1.xpose.msra.mxu0 %v359
        %714 = vmatprep.subr.mxu0 %v364
        %715 = vmatpush1.xpose.msra.mxu0 %v363
        %716 = vmatprep.subr.mxu0 %v368
        %717 = vmatpush1.xpose.msra.mxu0 %v367
        %718 = vmatprep.subr.mxu0 %v372
        %719 = vmatpush1.xpose.msra.mxu0 %v371
        %720 = vmatprep.subr.mxu0 %v376
        %721 = vmatpush1.xpose.msra.mxu0 %v375
        %722 = vmatprep.subr.mxu0 %v380
        %723 = vmatpush1.xpose.msra.mxu0 %v379
        %724 = vmatprep.subr.mxu0 %v384
        %725 = vmatpush1.xpose.msra.mxu0 %v383
        %726 = vmatprep.subr.mxu0 %v388
        %727 = vmatpush1.xpose.msra.mxu0 %v387
        %728 = vmatprep.subr.mxu0 %v392
        %729 = vmatpush1.xpose.msra.mxu0 %v391
        %730 = vmatprep.subr.mxu0 %v396
        %731 = vmatpush1.xpose.msra.mxu0 %v395
        %732 = vmatprep.subr.mxu0 %v400
        %733 = vmatpush1.xpose.msra.mxu0 %v399
        %734 = vmatprep.subr.mxu0 %v404
        %735 = vmatpush1.xpose.msra.mxu0 %v403
        %736 = vmatprep.subr.mxu0 %v408
        %737 = vmatpush1.xpose.msra.mxu0 %v407
        %738 = vmatprep.subr.mxu0 %v412
        %739 = vmatpush1.xpose.msra.mxu0 %v411
        %740 = vmatprep.subr.mxu0 %v416
        %741 = vmatpush1.xpose.msra.mxu0 %v415
        %742 = vmatprep.subr.mxu0 %v420
        %743 = vmatpush1.xpose.msra.mxu0 %v419
        %744 = vmatprep.subr.mxu0 %v424
        %745 = vmatpush1.xpose.msra.mxu0 %v423
        %746 = vmatprep.mubr.f32.mxu0 %v610
        %747 = vmatmul.mubr.f32.gmra.mrb[0].mxu0 %v609
        %v748 = vpop.f32.mrb[0].mxu0
        %v749 = vadd.f32 %v678, %v748
        %v750 = vpop.f32.mrb[0].mxu0
        %v751 = vadd.f32 %v680, %v750
        %752 = vdwg.mxu0
        %v753 = vadd.f32 %v603, %v749
        %v754 = vadd.f32 %v604, %v751
        %755 = vst [vmem:[#allocation3] sm:$0xff] %v753
        %756 = vst [vmem:[#allocation3 + $0x8] sm:$0xff] %v754
        %p757 = scmp.eq.s32.totalorder %s27, 1
        // Predicated region
        $region53: #{tpu_custom_call.1} parent=31 // pred_check
          %p758 = pneg %p757
        $region54: #{tpu_custom_call.1} parent=31 // pred_check_branch
          %760 = sbr.rel (%p758) target = $region56
        $region55: #{tpu_custom_call.1} parent=31 // pred_region
          %v761 = vld [vmem:[#allocation3] sm:$0xff]
          %v762 = vld [vmem:[#allocation3 + $0x8] sm:$0xff]
          %763 = vst [vmem:[#allocation13] sm:$0xff] %v761
          %764 = vst [vmem:[#allocation13 + $0x8] sm:$0xff] %v762
          %v765 = vld [vmem:[#allocation2] sm:$0xff]
          %v766 = vld [vmem:[#allocation2 + $0x8] sm:$0xff]
          %v767 = vld [vmem:[#allocation2 + $0x10] sm:$0xff]
          %v768 = vld [vmem:[#allocation2 + $0x18] sm:$0xff]
          %p769 = scmp.lt.s32.totalorder %s26, 0
          // Predicated region
          $region57: #{tpu_custom_call.1} parent=55 // pred_check
            %p770 = pneg %p769
          $region58: #{tpu_custom_call.1} parent=55 // pred_check_branch
            %772 = sbr.rel (%p770) target = $region60
          $region59: #{tpu_custom_call.1} parent=55 // pred_region
            %v773 = vld [vmem:[#allocation4] sm:$0xff]
            %v774 = vld [vmem:[#allocation4 + $0x8] sm:$0xff]
            %v775 = vmax.f32 %v765, %v766
            %776 = vmax.xlane.f32.xlu0 %v775
            %v777 = vpop.xlane.xlu0 %776
            %v778 = vmax.f32 %v767, %v768
            %779 = vmax.xlane.f32.xlu0 %v778
            %v780 = vpop.xlane.xlu0 %779
            %v781 = vmax.f32 %v773, %v777
            %v782 = vmax.f32 %v774, %v780
            %v783 = vsub.f32 %v773, %v781
            %v784 = vsub.f32 %v774, %v782
            %v785 = vmul.f32 %v783, 1.442695
            %v786 = vpow.pop %v785
            %v787 = vmul.f32 %v784, 1.442695
            %v788 = vpow.pop %v787
            %v789 = vld [vmem:[#allocation5] sm:$0xff]
            %v790 = vld [vmem:[#allocation5 + $0x8] sm:$0xff]
            %v791 = vmul.f32 %v786, %v789
            %v792 = vmul.f32 %v788, %v790
            %794 = vset.pattern.permute.xlu0 0
            %795 = vperm.xlu0 %794, %v781
            %v796 = vpop.permute.xlu0 %795
            %799 = vset.pattern.permute.xlu0 0
            %800 = vperm.xlu0 %799, %v782
            %v801 = vpop.permute.xlu0 %800
            %v803 = vsub.f32 %v765, %v796
            %v804 = vsub.f32 %v766, %v796
            %v805 = vsub.f32 %v767, %v801
            %v806 = vsub.f32 %v768, %v801
            %v807 = vmul.f32 %v803, 1.442695
            %v808 = vpow.pop %v807
            %v809 = vmul.f32 %v804, 1.442695
            %v810 = vpow.pop %v809
            %v811 = vmul.f32 %v805, 1.442695
            %v812 = vpow.pop %v811
            %v813 = vmul.f32 %v806, 1.442695
            %v814 = vpow.pop %v813
            %v815 = vadd.f32 %v808, %v810
            %816 = vadd.xlane.f32.xlu0 %v815
            %v817 = vpop.xlane.xlu0 %816
            %v818 = vadd.f32 %v812, %v814
            %819 = vadd.xlane.f32.xlu0 %v818
            %v820 = vpop.xlane.xlu0 %819
            %v821 = vadd.f32 %v791, %v817
            %v822 = vadd.f32 %v792, %v820
            %vm823 = vcmask 7168
            %824 = vst.msk [vmem:[#allocation5] sm:$0xff] %vm823, %v821
            %825 = vst.msk [vmem:[#allocation5 + $0x8] sm:$0xff] %vm823, %v822
            %826 = vst.msk [vmem:[#allocation4] sm:$0xff] %vm823, %v781
            %827 = vst.msk [vmem:[#allocation4 + $0x8] sm:$0xff] %vm823, %v782
          $region60: #{tpu_custom_call.1} parent=55 // pred_fallthru
            _
          // Predicated region
          $region61: #{tpu_custom_call.1} parent=55 // pred_check
            %p828 = pneg %p276
          $region62: #{tpu_custom_call.1} parent=55 // pred_check_branch
            %830 = sbr.rel (%p828) target = $region64
          $region63: #{tpu_custom_call.1} parent=55 // pred_region
            %s831 = smul.u32 %s26, 256
            %v832 = vlaneseq
            %v833 = vand.u32 %v832, 127
            %v834 = vadd.s32 %v833, 128
            %v835 = vstv %s831
            %v836 = vadd.s32 %v835, %v833
            %v837 = vadd.s32 %v835, %v834
            %vm838 = vcmp.lt.s32.totalorder %v836, 250
            %vm839 = vcmp.lt.s32.totalorder %v837, 250
            %v840 = vsel %vm838, %v765, -1e+30
            %v841 = vsel %vm839, %v766, -1e+30
            %v842 = vsel %vm838, %v767, -1e+30
            %v843 = vsel %vm839, %v768, -1e+30
            %v844 = vld [vmem:[#allocation4] sm:$0xff]
            %v845 = vld [vmem:[#allocation4 + $0x8] sm:$0xff]
            %v846 = vmax.f32 %v840, %v841
            %847 = vmax.xlane.f32.xlu0 %v846
            %v848 = vpop.xlane.xlu0 %847
            %v849 = vmax.f32 %v842, %v843
            %850 = vmax.xlane.f32.xlu0 %v849
            %v851 = vpop.xlane.xlu0 %850
            %v852 = vmax.f32 %v844, %v848
            %v853 = vmax.f32 %v845, %v851
            %v854 = vsub.f32 %v844, %v852
            %v855 = vsub.f32 %v845, %v853
            %v856 = vmul.f32 %v854, 1.442695
            %v857 = vpow.pop %v856
            %v858 = vmul.f32 %v855, 1.442695
            %v859 = vpow.pop %v858
            %v860 = vld [vmem:[#allocation5] sm:$0xff]
            %v861 = vld [vmem:[#allocation5 + $0x8] sm:$0xff]
            %v862 = vmul.f32 %v857, %v860
            %v863 = vmul.f32 %v859, %v861
            %865 = vset.pattern.permute.xlu0 0
            %866 = vperm.xlu0 %865, %v852
            %v867 = vpop.permute.xlu0 %866
            %870 = vset.pattern.permute.xlu0 0
            %871 = vperm.xlu0 %870, %v853
            %v872 = vpop.permute.xlu0 %871
            %v874 = vsub.f32 %v840, %v867
            %v875 = vsub.f32 %v841, %v867
            %v876 = vsub.f32 %v842, %v872
            %v877 = vsub.f32 %v843, %v872
            %v878 = vmul.f32 %v874, 1.442695
            %v879 = vpow.pop %v878
            %v880 = vmul.f32 %v875, 1.442695
            %v881 = vpow.pop %v880
            %v882 = vmul.f32 %v876, 1.442695
            %v883 = vpow.pop %v882
            %v884 = vmul.f32 %v877, 1.442695
            %v885 = vpow.pop %v884
            %v886 = vadd.f32 %v879, %v881
            %887 = vadd.xlane.f32.xlu0 %v886
            %v888 = vpop.xlane.xlu0 %887
            %v889 = vadd.f32 %v883, %v885
            %890 = vadd.xlane.f32.xlu0 %v889
            %v891 = vpop.xlane.xlu0 %890
            %v892 = vadd.f32 %v862, %v888
            %v893 = vadd.f32 %v863, %v891
            %vm894 = vcmask 7168
            %895 = vst.msk [vmem:[#allocation5] sm:$0xff] %vm894, %v892
            %896 = vst.msk [vmem:[#allocation5 + $0x8] sm:$0xff] %vm894, %v893
            %897 = vst.msk [vmem:[#allocation4] sm:$0xff] %vm894, %v852
            %898 = vst.msk [vmem:[#allocation4 + $0x8] sm:$0xff] %vm894, %v853
            %v899 = vld [vmem:[#allocation4] sm:$0xff]
            %v900 = vld [vmem:[#allocation4 + $0x8] sm:$0xff]
            %902 = vset.pattern.permute.xlu0 0
            %903 = vperm.xlu0 %902, %v899
            %v904 = vpop.permute.xlu0 %903
            %907 = vset.pattern.permute.xlu0 0
            %908 = vperm.xlu0 %907, %v900
            %v909 = vpop.permute.xlu0 %908
            %911 = vst [vmem:[#allocation12] sm:$0xff] %v904
            %912 = vst [vmem:[#allocation12 + $0x10] sm:$0xff] %v909
            %v913 = vld [vmem:[#allocation5] sm:$0xff]
            %v914 = vld [vmem:[#allocation5 + $0x8] sm:$0xff]
            %916 = vset.pattern.permute.xlu0 0
            %917 = vperm.xlu0 %916, %v913
            %v918 = vpop.permute.xlu0 %917
            %921 = vset.pattern.permute.xlu0 0
            %922 = vperm.xlu0 %921, %v914
            %v923 = vpop.permute.xlu0 %922
            %925 = vst [vmem:[#allocation12 + $0x8] sm:$0xff] %v918
            %926 = vst [vmem:[#allocation12 + $0x18] sm:$0xff] %v923
          $region64: #{tpu_custom_call.1} parent=55 // pred_fallthru
            _
        $region56: #{tpu_custom_call.1} parent=31 // pred_fallthru
          _
        // Predicated region
        $region65: #{tpu_custom_call.1} parent=31 // pred_check
          %p927 = pneg %p132
        $region66: #{tpu_custom_call.1} parent=31 // pred_check_branch
          %929 = sbr.rel (%p927) target = $region68
        $region67: #{tpu_custom_call.1} parent=31 // pred_region
          %s930 = smul.u32 2, %s25
          %s932 = ssub.s32 512, 512
          %933 = vsyncadd [#allocation8], %s932
          %s934 = smul.addr %s930, 2
          %s935 = smul.addr %s934, 128
          %s936 = scalar_lea.hbm %s3, %s935
          %s937 = sshll.u32 [#allocation12], 4
          %s938 = int_to_ptr.vmem [resolvable:$true] %s937
          %943 = dma.vmem_to_hbm [thread:$0]  %s938, 512, %s936, [#allocation8], 256, 256, 16
        $region68: #{tpu_custom_call.1} parent=31 // pred_fallthru
          _
        // Predicated region
        $region69: #{tpu_custom_call.1} parent=31 // pred_check
          %p944 = pneg %p158
        $region70: #{tpu_custom_call.1} parent=31 // pred_check_branch
          %946 = sbr.rel (%p944) target = $region72
        $region71: #{tpu_custom_call.1} parent=31 // pred_region
          %s947 = smul.u32 2, %s26
          %s949 = ssub.s32 256, 256
          %950 = vsyncadd [#allocation14], %s949
          %s951 = smul.addr %s947, 128
          %s952 = scalar_lea.hbm %s4, %s951
          %s954 = sshll.u32 [#allocation13], 4
          %s955 = int_to_ptr.vmem [resolvable:$true] %s954
          %957 = dma.vmem_to_hbm [thread:$0]  %s955, 256, %s952, [#allocation14]
        $region72: #{tpu_custom_call.1} parent=31 // pred_fallthru
          _
        // Predicated region
        $region73: #{tpu_custom_call.1} parent=31 // pred_check
          %p958 = pneg %p132
        $region74: #{tpu_custom_call.1} parent=31 // pred_check_branch
          %960 = sbr.rel (%p958) target = $region76
        $region75: #{tpu_custom_call.1} parent=31 // pred_region
          %961 = dma.done [#allocation8], 512
        $region76: #{tpu_custom_call.1} parent=31 // pred_fallthru
          _
        // Predicated region
        $region77: #{tpu_custom_call.1} parent=31 // pred_check
          %p962 = pneg %p158
        $region78: #{tpu_custom_call.1} parent=31 // pred_check_branch
          %964 = sbr.rel (%p962) target = $region80
        $region79: #{tpu_custom_call.1} parent=31 // pred_region
          %965 = dma.done [#allocation14], 256
        $region80: #{tpu_custom_call.1} parent=31 // pred_fallthru
          _
      $region32: #{tpu_custom_call.1} parent=5 // pred_fallthru
        _
      %p966 = scmp.le.s32.totalorder 2, %s15
      // Predicated region
      $region81: #{tpu_custom_call.1} parent=5 // pred_check
        %p967 = pneg %p966
      $region82: #{tpu_custom_call.1} parent=5 // pred_check_branch
        %969 = sbr.rel (%p967) target = $region84
      $region83: #{tpu_custom_call.1} parent=5 // pred_region
        %s970 = ssub.s32 %s15, 2
      $region84: #{tpu_custom_call.1} parent=5 // pred_fallthru
        _
    $region6: #{tpu_custom_call.1} parent=1 // loop_footer
      %s19 = sadd.s32 1, %s15
    $region7: #{tpu_custom_call.1} parent=1 // loop_footer_branch
      %14 = sbr.rel target = $region3
    $region8: #{tpu_custom_call.1} parent=1 // loop_exit
      _
    %971 = vsyncpa [#allocation7], 1
    %s972 = scalar_lea.sflag [#allocation7], 1
    %973 = vsyncpa %s972, 1
    %974 = vsyncpa [#allocation10], 1
    %975 = vsyncpa [#allocation8], 1
    %s976 = scalar_lea.sflag [#allocation8], 1
    %977 = vsyncpa %s976, 1
    %978 = vsyncpa [#allocation14], 1

</llo_original>
